<compile_context>
chip_gen: v5e
topology: v5e:2x2
jax: 0.10.0
libtpu: 0.0.40
codegen_flags: <defaults>
</compile_context>

<pallas_src>
import functools

import jax
import jax.numpy as jnp
from jax.experimental import pallas as pl
from jax.experimental.pallas import tpu as pltpu

EPS = 1e-5


def _round_up(x, m):
    return (x + m - 1) // m * m


def _resblock_kernel(x_ref, w1_ref, g1_ref, be1_ref, w2_ref, g2_ref, be2_ref,
                     o_ref, xp_ref, col_ref, *, H, W):
    """Fused residual block on one grid point (everything resident in VMEM).

    x_ref   : (P, N)            activations, N = B*H*W (lane-dense), P = pad(C)
    w*_ref  : (P, 9*P)          stacked conv weights [c_out, tap*P + c_in]
    g*_ref  : (P, 1)            BN gamma
    be*_ref : (P, 1)            BN beta
    o_ref   : (P, N)            output
    xp_ref  : (P, N + 2*(W+1))  zero-border flat scratch for the tap shifts
    col_ref : (9*P, N)          im2col-lite scratch (9 stacked tap windows)
    """
    P, N = x_ref.shape
    PAD = W + 1
    taps = [(dh, dw) for dh in (-1, 0, 1) for dw in (-1, 0, 1)]

    # ---- per-tap edge-validity masks, generated in-kernel (once) ----------
    n_idx = jax.lax.broadcasted_iota(jnp.int32, (1, N), 1)
    if (W & (W - 1)) == 0 and (H & (H - 1)) == 0:
        # power-of-two spatial dims: pure bit ops on the VPU
        w_idx = jnp.bitwise_and(n_idx, W - 1)
        h_idx = jnp.bitwise_and(n_idx >> (W.bit_length() - 1), H - 1)
    else:
        w_idx = n_idx % W
        h_idx = (n_idx // W) % H

    masks = []
    for dh, dw in taps:
        if dh == 0 and dw == 0:
            masks.append(None)          # center tap: always valid, skip mul
            continue
        conds = []
        if dh < 0:
            conds.append(h_idx >= -dh)
        if dh > 0:
            conds.append(h_idx < H - dh)
        if dw < 0:
            conds.append(w_idx >= -dw)
        if dw > 0:
            conds.append(w_idx < W - dw)
        ok = conds[0]
        for c in conds[1:]:
            ok = ok & c
        masks.append(ok.astype(jnp.float32))          # (1, N)

    # ---- zero ONLY the pad borders of the shift scratch (kept zero) -------
    xp_ref[:, :PAD] = jnp.zeros((P, PAD), jnp.float32)
    xp_ref[:, PAD + N:] = jnp.zeros((P, PAD), jnp.float32)

    def conv3x3(act, w_ref):
        # im2col-lite: stage the slab once, stack the 9 masked shifted
        # windows into col_ref, then ONE MXU contraction with K = 9*P.
        xp_ref[:, PAD:PAD + N] = act
        for t, (dh, dw) in enumerate(taps):
            s = dh * W + dw
            win = xp_ref[:, PAD + s:PAD + s + N]       # (P, N)
            if masks[t] is not None:
                win = win * masks[t]
            col_ref[t * P:(t + 1) * P, :] = win        # 8-aligned sublane slice
        # out[o, n] = sum_{t,i} w[o, t*P+i] * col[t*P+i, n]
        return jnp.dot(w_ref[...], col_ref[...],
                       preferred_element_type=jnp.float32)
        # conv bias intentionally omitted (cancelled by training-mode BN)

    def batchnorm(y, g_ref, be_ref):
        # Training-mode BN, two-pass (numerically safe) variance.
        inv_n = 1.0 / N
        mean = jnp.sum(y, axis=1, keepdims=True) * inv_n        # (P, 1)
        yc = y - mean
        var = jnp.sum(yc * yc, axis=1, keepdims=True) * inv_n   # biased var
        scale = jax.lax.rsqrt(var + EPS) * g_ref[...]
        return yc * scale + be_ref[...]

    x = x_ref[...]
    h = jnp.maximum(batchnorm(conv3x3(x, w1_ref), g1_ref, be1_ref), 0.0)
    out = batchnorm(conv3x3(h, w2_ref), g2_ref, be2_ref)
    o_ref[...] = jnp.maximum(out + x, 0.0)


def residual_block_pallas(x_nchw, params):
    """ResidualBlock forward.  x_nchw: (B, C, H, W) float32 (PyTorch layout)."""
    B, C, H, W = x_nchw.shape
    N = B * H * W
    P = _round_up(C, 8)        # pad channels to a sublane multiple

    # NCHW -> (C, B*H*W): cheap leading-dim permute; zero-pad channels to P.
    x2 = jnp.transpose(x_nchw.astype(jnp.float32), (1, 0, 2, 3)).reshape(C, N)
    x2 = jnp.pad(x2, ((0, P - C), (0, 0)))

    def pack_w(w_hwio):
        # HWIO (3,3,Ci,Co) -> (Co,3,3,Ci) -> zero-pad -> (P, 9*P),
        # flat index = (kh*3 + kw)*P + ci  (matches the kernel's tap order).
        w = jnp.transpose(w_hwio.astype(jnp.float32), (3, 0, 1, 2))
        w = jnp.pad(w, ((0, P - C), (0, 0), (0, 0), (0, P - C)))
        return w.reshape(P, 9 * P)

    def pack_v(v):
        # (C,) -> (P, 1); padded gamma/beta rows are 0 -> padded outputs stay 0
        return jnp.pad(v.astype(jnp.float32), (0, P - C)).reshape(P, 1)

    w1 = pack_w(params["w1"])
    w2 = pack_w(params["w2"])
    g1, be1 = pack_v(params["g1"]), pack_v(params["be1"])
    g2, be2 = pack_v(params["g2"]), pack_v(params["be2"])
    # conv biases intentionally NOT passed: training-mode BN cancels them.

    vmem = pl.BlockSpec(memory_space=pltpu.MemorySpace.VMEM)
    out2 = pl.pallas_call(
        functools.partial(_resblock_kernel, H=H, W=W),
        out_shape=jax.ShapeDtypeStruct((P, N), jnp.float32),
        in_specs=[vmem] * 7,
        out_specs=vmem,
        scratch_shapes=[
            pltpu.VMEM((P, N + 2 * (W + 1)), jnp.float32),   # shift scratch
            pltpu.VMEM((9 * P, N), jnp.float32),             # im2col scratch
        ],
        compiler_params=pltpu.CompilerParams(
            vmem_limit_bytes=64 * 1024 * 1024),
    )(x2, w1, g1, be1, w2, g2, be2)

    # (P, B*H*W) -> drop padded channels -> NCHW
    return jnp.transpose(out2[:C].reshape(C, B, H, W), (1, 0, 2, 3))


def residual_block_reference(x_nchw, params):
    """Pure-JAX reference (same math, conv bias kept) for correctness check."""
    x = jnp.transpose(x_nchw, (0, 2, 3, 1)).astype(jnp.float32)

    def conv(y, w, b):
        out = jax.lax.conv_general_dilated(
            y, w, window_strides=(1, 1), padding="SAME",
            dimension_numbers=("NHWC", "HWIO", "NHWC"),
            precision=jax.lax.Precision.HIGHEST)
        return out + b.reshape(1, 1, 1, -1)

    def bn(y, g, be):
        m = jnp.mean(y, axis=(0, 1, 2), keepdims=True)
        v = jnp.mean((y - m) ** 2, axis=(0, 1, 2), keepdims=True)
        return (y - m) * jax.lax.rsqrt(v + EPS) * g.reshape(1, 1, 1, -1) \
            + be.reshape(1, 1, 1, -1)

    h = jax.nn.relu(bn(conv(x, params["w1"], params["cb1"]),
                       params["g1"], params["be1"]))
    o = bn(conv(h, params["w2"], params["cb2"]), params["g2"], params["be2"])
    o = jax.nn.relu(o + x)
    return jnp.transpose(o, (0, 3, 1, 2))


def make_params(key, channels):
    """Deterministic synthetic parameters (shapes match nn.Conv2d/BatchNorm2d)."""
    ks = jax.random.split(key, 8)
    C = channels
    return {
        # conv weights in HWIO: (3, 3, C_in, C_out)
        "w1": 0.1 * jax.random.normal(ks[0], (3, 3, C, C), jnp.float32),
        "cb1": 0.05 * jax.random.normal(ks[1], (C,), jnp.float32),
        "w2": 0.1 * jax.random.normal(ks[2], (3, 3, C, C), jnp.float32),
        "cb2": 0.05 * jax.random.normal(ks[3], (C,), jnp.float32),
        "g1": 1.0 + 0.1 * jax.random.normal(ks[4], (C,), jnp.float32),
        "be1": 0.1 * jax.random.normal(ks[5], (C,), jnp.float32),
        "g2": 1.0 + 0.1 * jax.random.normal(ks[6], (C,), jnp.float32),
        "be2": 0.1 * jax.random.normal(ks[7], (C,), jnp.float32),
    }


if __name__ == "__main__":
    B, C, H, W = 2, 4, 16, 16
    key = jax.random.PRNGKey(0)
    k_x, k_p = jax.random.split(key)
    x = jax.random.normal(k_x, (B, C, H, W), jnp.float32)   # NCHW, like PyTorch
    params = make_params(k_p, C)

    run = jax.jit(functools.partial(residual_block_pallas, params=params))
    out = run(x)
    jax.block_until_ready(out)

    ref = residual_block_reference(x, params)
    assert out.shape == (B, C, H, W)
    assert jnp.allclose(out, ref, atol=1e-3, rtol=1e-3), \
        f"max abs err {jnp.max(jnp.abs(out - ref))}"

    print("KERNEL_OK")
</pallas_src>

<mosaic_0001>
module attributes {stable_mosaic.version = 11 : i64} {
  func.func @_resblock_kernel(%arg0: memref<8x512xf32, #tpu.memory_space<vmem>>, %arg1: memref<8x72xf32, #tpu.memory_space<vmem>>, %arg2: memref<8x1xf32, #tpu.memory_space<vmem>>, %arg3: memref<8x1xf32, #tpu.memory_space<vmem>>, %arg4: memref<8x72xf32, #tpu.memory_space<vmem>>, %arg5: memref<8x1xf32, #tpu.memory_space<vmem>>, %arg6: memref<8x1xf32, #tpu.memory_space<vmem>>, %arg7: memref<8x512xf32, #tpu.memory_space<vmem>>, %arg8: memref<8x546xf32, #tpu.memory_space<vmem>>, %arg9: memref<72x512xf32, #tpu.memory_space<vmem>>) attributes {dimension_semantics = [], scalar_prefetch = 0 : i64, scratch_operands = 2 : i64, tpu.core_type = #tpu.core_type<tc>} {
    %0 = tpu.iota {dimensions = array<i32: 1>} : vector<1x512xi32>
    %c15_i32 = arith.constant 15 : i32
    %1 = vector.broadcast %c15_i32 : i32 to vector<1x512xi32>
    %2 = arith.andi %0, %1 : vector<1x512xi32>
    %c4_i32 = arith.constant 4 : i32
    %3 = vector.broadcast %c4_i32 : i32 to vector<1x512xi32>
    %4 = arith.shrsi %0, %3 : vector<1x512xi32>
    %c15_i32_0 = arith.constant 15 : i32
    %5 = vector.broadcast %c15_i32_0 : i32 to vector<1x512xi32>
    %6 = arith.andi %4, %5 : vector<1x512xi32>
    %c1_i32 = arith.constant 1 : i32
    %7 = vector.broadcast %c1_i32 : i32 to vector<1x512xi32>
    %8 = arith.cmpi sge, %6, %7 : vector<1x512xi32>
    %c1_i32_1 = arith.constant 1 : i32
    %9 = vector.broadcast %c1_i32_1 : i32 to vector<1x512xi32>
    %10 = arith.cmpi sge, %2, %9 : vector<1x512xi32>
    %11 = arith.andi %8, %10 : vector<1x512xi1>
    %12 = arith.extui %11 : vector<1x512xi1> to vector<1x512xi32>
    %13 = arith.sitofp %12 : vector<1x512xi32> to vector<1x512xf32>
    %c1_i32_2 = arith.constant 1 : i32
    %14 = vector.broadcast %c1_i32_2 : i32 to vector<1x512xi32>
    %15 = arith.cmpi sge, %6, %14 : vector<1x512xi32>
    %16 = arith.extui %15 : vector<1x512xi1> to vector<1x512xi32>
    %17 = arith.sitofp %16 : vector<1x512xi32> to vector<1x512xf32>
    %c1_i32_3 = arith.constant 1 : i32
    %18 = vector.broadcast %c1_i32_3 : i32 to vector<1x512xi32>
    %19 = arith.cmpi sge, %6, %18 : vector<1x512xi32>
    %c15_i32_4 = arith.constant 15 : i32
    %20 = vector.broadcast %c15_i32_4 : i32 to vector<1x512xi32>
    %21 = arith.cmpi slt, %2, %20 : vector<1x512xi32>
    %22 = arith.andi %19, %21 : vector<1x512xi1>
    %23 = arith.extui %22 : vector<1x512xi1> to vector<1x512xi32>
    %24 = arith.sitofp %23 : vector<1x512xi32> to vector<1x512xf32>
    %c1_i32_5 = arith.constant 1 : i32
    %25 = vector.broadcast %c1_i32_5 : i32 to vector<1x512xi32>
    %26 = arith.cmpi sge, %2, %25 : vector<1x512xi32>
    %27 = arith.extui %26 : vector<1x512xi1> to vector<1x512xi32>
    %28 = arith.sitofp %27 : vector<1x512xi32> to vector<1x512xf32>
    %c15_i32_6 = arith.constant 15 : i32
    %29 = vector.broadcast %c15_i32_6 : i32 to vector<1x512xi32>
    %30 = arith.cmpi slt, %2, %29 : vector<1x512xi32>
    %31 = arith.extui %30 : vector<1x512xi1> to vector<1x512xi32>
    %32 = arith.sitofp %31 : vector<1x512xi32> to vector<1x512xf32>
    %c15_i32_7 = arith.constant 15 : i32
    %33 = vector.broadcast %c15_i32_7 : i32 to vector<1x512xi32>
    %34 = arith.cmpi slt, %6, %33 : vector<1x512xi32>
    %c1_i32_8 = arith.constant 1 : i32
    %35 = vector.broadcast %c1_i32_8 : i32 to vector<1x512xi32>
    %36 = arith.cmpi sge, %2, %35 : vector<1x512xi32>
    %37 = arith.andi %34, %36 : vector<1x512xi1>
    %38 = arith.extui %37 : vector<1x512xi1> to vector<1x512xi32>
    %39 = arith.sitofp %38 : vector<1x512xi32> to vector<1x512xf32>
    %c15_i32_9 = arith.constant 15 : i32
    %40 = vector.broadcast %c15_i32_9 : i32 to vector<1x512xi32>
    %41 = arith.cmpi slt, %6, %40 : vector<1x512xi32>
    %42 = arith.extui %41 : vector<1x512xi1> to vector<1x512xi32>
    %43 = arith.sitofp %42 : vector<1x512xi32> to vector<1x512xf32>
    %c15_i32_10 = arith.constant 15 : i32
    %44 = vector.broadcast %c15_i32_10 : i32 to vector<1x512xi32>
    %45 = arith.cmpi slt, %6, %44 : vector<1x512xi32>
    %c15_i32_11 = arith.constant 15 : i32
    %46 = vector.broadcast %c15_i32_11 : i32 to vector<1x512xi32>
    %47 = arith.cmpi slt, %2, %46 : vector<1x512xi32>
    %48 = arith.andi %45, %47 : vector<1x512xi1>
    %49 = arith.extui %48 : vector<1x512xi1> to vector<1x512xi32>
    %50 = arith.sitofp %49 : vector<1x512xi32> to vector<1x512xf32>
    %cst = arith.constant 0.000000e+00 : f32
    %51 = vector.broadcast %cst : f32 to vector<8x17xf32>
    %c0 = arith.constant 0 : index
    %c0_12 = arith.constant 0 : index
    %52 = vector.load %arg8[%c0, %c0_12] : memref<8x546xf32, #tpu.memory_space<vmem>>, vector<8x17xf32>
    tpu.vector_store %arg8[%c0, %c0_12], %51 {strides = array<i32>} : memref<8x546xf32, #tpu.memory_space<vmem>>, vector<8x17xf32>,
    %cst_13 = arith.constant 0.000000e+00 : f32
    %53 = vector.broadcast %cst_13 : f32 to vector<8x17xf32>
    %c0_14 = arith.constant 0 : index
    %c529 = arith.constant 529 : index
    %54 = vector.load %arg8[%c0_14, %c529] : memref<8x546xf32, #tpu.memory_space<vmem>>, vector<8x17xf32>
    tpu.vector_store %arg8[%c0_14, %c529], %53 {strides = array<i32>} : memref<8x546xf32, #tpu.memory_space<vmem>>, vector<8x17xf32>,
    %c0_15 = arith.constant 0 : index
    %c0_16 = arith.constant 0 : index
    %55 = vector.load %arg0[%c0_15, %c0_16] : memref<8x512xf32, #tpu.memory_space<vmem>>, vector<8x512xf32>
    %c0_17 = arith.constant 0 : index
    %c17 = arith.constant 17 : index
    %56 = vector.load %arg8[%c0_17, %c17] : memref<8x546xf32, #tpu.memory_space<vmem>>, vector<8x512xf32>
    tpu.vector_store %arg8[%c0_17, %c17], %55 {strides = array<i32>} : memref<8x546xf32, #tpu.memory_space<vmem>>, vector<8x512xf32>,
    %c0_18 = arith.constant 0 : index
    %c0_19 = arith.constant 0 : index
    %57 = vector.load %arg8[%c0_18, %c0_19] : memref<8x546xf32, #tpu.memory_space<vmem>>, vector<8x512xf32>
    %58 = vector.broadcast %13 : vector<1x512xf32> to vector<8x512xf32>
    %59 = arith.mulf %57, %58 : vector<8x512xf32>
    %c0_20 = arith.constant 0 : index
    %c0_21 = arith.constant 0 : index
    %60 = vector.load %arg9[%c0_20, %c0_21] : memref<72x512xf32, #tpu.memory_space<vmem>>, vector<8x512xf32>
    tpu.vector_store %arg9[%c0_20, %c0_21], %59 {strides = array<i32>} : memref<72x512xf32, #tpu.memory_space<vmem>>, vector<8x512xf32>,
    %c0_22 = arith.constant 0 : index
    %c1 = arith.constant 1 : index
    %61 = vector.load %arg8[%c0_22, %c1] : memref<8x546xf32, #tpu.memory_space<vmem>>, vector<8x512xf32>
    %62 = vector.broadcast %17 : vector<1x512xf32> to vector<8x512xf32>
    %63 = arith.mulf %61, %62 : vector<8x512xf32>
    %c8 = arith.constant 8 : index
    %c0_23 = arith.constant 0 : index
    %64 = vector.load %arg9[%c8, %c0_23] : memref<72x512xf32, #tpu.memory_space<vmem>>, vector<8x512xf32>
    tpu.vector_store %arg9[%c8, %c0_23], %63 {strides = array<i32>} : memref<72x512xf32, #tpu.memory_space<vmem>>, vector<8x512xf32>,
    %c0_24 = arith.constant 0 : index
    %c2 = arith.constant 2 : index
    %65 = vector.load %arg8[%c0_24, %c2] : memref<8x546xf32, #tpu.memory_space<vmem>>, vector<8x512xf32>
    %66 = vector.broadcast %24 : vector<1x512xf32> to vector<8x512xf32>
    %67 = arith.mulf %65, %66 : vector<8x512xf32>
    %c16 = arith.constant 16 : index
    %c0_25 = arith.constant 0 : index
    %68 = vector.load %arg9[%c16, %c0_25] : memref<72x512xf32, #tpu.memory_space<vmem>>, vector<8x512xf32>
    tpu.vector_store %arg9[%c16, %c0_25], %67 {strides = array<i32>} : memref<72x512xf32, #tpu.memory_space<vmem>>, vector<8x512xf32>,
    %c0_26 = arith.constant 0 : index
    %c16_27 = arith.constant 16 : index
    %69 = vector.load %arg8[%c0_26, %c16_27] : memref<8x546xf32, #tpu.memory_space<vmem>>, vector<8x512xf32>
    %70 = vector.broadcast %28 : vector<1x512xf32> to vector<8x512xf32>
    %71 = arith.mulf %69, %70 : vector<8x512xf32>
    %c24 = arith.constant 24 : index
    %c0_28 = arith.constant 0 : index
    %72 = vector.load %arg9[%c24, %c0_28] : memref<72x512xf32, #tpu.memory_space<vmem>>, vector<8x512xf32>
    tpu.vector_store %arg9[%c24, %c0_28], %71 {strides = array<i32>} : memref<72x512xf32, #tpu.memory_space<vmem>>, vector<8x512xf32>,
    %c0_29 = arith.constant 0 : index
    %c17_30 = arith.constant 17 : index
    %73 = vector.load %arg8[%c0_29, %c17_30] : memref<8x546xf32, #tpu.memory_space<vmem>>, vector<8x512xf32>
    %c32 = arith.constant 32 : index
    %c0_31 = arith.constant 0 : index
    %74 = vector.load %arg9[%c32, %c0_31] : memref<72x512xf32, #tpu.memory_space<vmem>>, vector<8x512xf32>
    tpu.vector_store %arg9[%c32, %c0_31], %73 {strides = array<i32>} : memref<72x512xf32, #tpu.memory_space<vmem>>, vector<8x512xf32>,
    %c0_32 = arith.constant 0 : index
    %c18 = arith.constant 18 : index
    %75 = vector.load %arg8[%c0_32, %c18] : memref<8x546xf32, #tpu.memory_space<vmem>>, vector<8x512xf32>
    %76 = vector.broadcast %32 : vector<1x512xf32> to vector<8x512xf32>
    %77 = arith.mulf %75, %76 : vector<8x512xf32>
    %c40 = arith.constant 40 : index
    %c0_33 = arith.constant 0 : index
    %78 = vector.load %arg9[%c40, %c0_33] : memref<72x512xf32, #tpu.memory_space<vmem>>, vector<8x512xf32>
    tpu.vector_store %arg9[%c40, %c0_33], %77 {strides = array<i32>} : memref<72x512xf32, #tpu.memory_space<vmem>>, vector<8x512xf32>,
    %c0_34 = arith.constant 0 : index
    %c32_35 = arith.constant 32 : index
    %79 = vector.load %arg8[%c0_34, %c32_35] : memref<8x546xf32, #tpu.memory_space<vmem>>, vector<8x512xf32>
    %80 = vector.broadcast %39 : vector<1x512xf32> to vector<8x512xf32>
    %81 = arith.mulf %79, %80 : vector<8x512xf32>
    %c48 = arith.constant 48 : index
    %c0_36 = arith.constant 0 : index
    %82 = vector.load %arg9[%c48, %c0_36] : memref<72x512xf32, #tpu.memory_space<vmem>>, vector<8x512xf32>
    tpu.vector_store %arg9[%c48, %c0_36], %81 {strides = array<i32>} : memref<72x512xf32, #tpu.memory_space<vmem>>, vector<8x512xf32>,
    %c0_37 = arith.constant 0 : index
    %c33 = arith.constant 33 : index
    %83 = vector.load %arg8[%c0_37, %c33] : memref<8x546xf32, #tpu.memory_space<vmem>>, vector<8x512xf32>
    %84 = vector.broadcast %43 : vector<1x512xf32> to vector<8x512xf32>
    %85 = arith.mulf %83, %84 : vector<8x512xf32>
    %c56 = arith.constant 56 : index
    %c0_38 = arith.constant 0 : index
    %86 = vector.load %arg9[%c56, %c0_38] : memref<72x512xf32, #tpu.memory_space<vmem>>, vector<8x512xf32>
    tpu.vector_store %arg9[%c56, %c0_38], %85 {strides = array<i32>} : memref<72x512xf32, #tpu.memory_space<vmem>>, vector<8x512xf32>,
    %c0_39 = arith.constant 0 : index
    %c34 = arith.constant 34 : index
    %87 = vector.load %arg8[%c0_39, %c34] : memref<8x546xf32, #tpu.memory_space<vmem>>, vector<8x512xf32>
    %88 = vector.broadcast %50 : vector<1x512xf32> to vector<8x512xf32>
    %89 = arith.mulf %87, %88 : vector<8x512xf32>
    %c64 = arith.constant 64 : index
    %c0_40 = arith.constant 0 : index
    %90 = vector.load %arg9[%c64, %c0_40] : memref<72x512xf32, #tpu.memory_space<vmem>>, vector<8x512xf32>
    tpu.vector_store %arg9[%c64, %c0_40], %89 {strides = array<i32>} : memref<72x512xf32, #tpu.memory_space<vmem>>, vector<8x512xf32>,
    %c0_41 = arith.constant 0 : index
    %c0_42 = arith.constant 0 : index
    %91 = vector.load %arg1[%c0_41, %c0_42] : memref<8x72xf32, #tpu.memory_space<vmem>>, vector<8x72xf32>
    %c0_43 = arith.constant 0 : index
    %c0_44 = arith.constant 0 : index
    %92 = vector.load %arg9[%c0_43, %c0_44] : memref<72x512xf32, #tpu.memory_space<vmem>>, vector<72x512xf32>
    %cst_45 = arith.constant dense<0.000000e+00> : vector<8x512xf32>
    %93 = tpu.matmul %91, %92, %cst_45 {dimension_numbers = #tpu.dot_dimension_numbers<[1], [0], [0], [1], [0, 0, 1, 1], [], []>} : vector<8x72xf32>, vector<72x512xf32>, vector<8x512xf32> -> vector<8x512xf32>
    %cst_46 = arith.constant dense<0.000000e+00> : vector<8xf32>
    %94 = vector.multi_reduction <add>, %93, %cst_46 [1] : vector<8x512xf32> to vector<8xf32>
    %95 = vector.shape_cast %94 : vector<8xf32> to vector<8x1xf32>
    %cst_47 = arith.constant 0.001953125 : f32
    %96 = vector.broadcast %cst_47 : f32 to vector<8x1xf32>
    %97 = arith.mulf %95, %96 : vector<8x1xf32>
    %98 = vector.broadcast %97 : vector<8x1xf32> to vector<8x512xf32>
    %99 = arith.subf %93, %98 : vector<8x512xf32>
    %100 = arith.mulf %99, %99 : vector<8x512xf32>
    %cst_48 = arith.constant dense<0.000000e+00> : vector<8xf32>
    %101 = vector.multi_reduction <add>, %100, %cst_48 [1] : vector<8x512xf32> to vector<8xf32>
    %102 = vector.shape_cast %101 : vector<8xf32> to vector<8x1xf32>
    %cst_49 = arith.constant 0.001953125 : f32
    %103 = vector.broadcast %cst_49 : f32 to vector<8x1xf32>
    %104 = arith.mulf %102, %103 : vector<8x1xf32>
    %cst_50 = arith.constant 9.99999974E-6 : f32
    %105 = vector.broadcast %cst_50 : f32 to vector<8x1xf32>
    %106 = arith.addf %104, %105 : vector<8x1xf32>
    %107 = math.rsqrt %106 : vector<8x1xf32>
    %c0_51 = arith.constant 0 : index
    %c0_52 = arith.constant 0 : index
    %108 = vector.load %arg2[%c0_51, %c0_52] : memref<8x1xf32, #tpu.memory_space<vmem>>, vector<8x1xf32>
    %109 = arith.mulf %107, %108 : vector<8x1xf32>
    %110 = vector.broadcast %109 : vector<8x1xf32> to vector<8x512xf32>
    %111 = arith.mulf %99, %110 : vector<8x512xf32>
    %c0_53 = arith.constant 0 : index
    %c0_54 = arith.constant 0 : index
    %112 = vector.load %arg3[%c0_53, %c0_54] : memref<8x1xf32, #tpu.memory_space<vmem>>, vector<8x1xf32>
    %113 = vector.broadcast %112 : vector<8x1xf32> to vector<8x512xf32>
    %114 = arith.addf %111, %113 : vector<8x512xf32>
    %cst_55 = arith.constant 0.000000e+00 : f32
    %115 = vector.broadcast %cst_55 : f32 to vector<8x512xf32>
    %116 = arith.maximumf %114, %115 : vector<8x512xf32>
    %c0_56 = arith.constant 0 : index
    %c17_57 = arith.constant 17 : index
    %117 = vector.load %arg8[%c0_56, %c17_57] : memref<8x546xf32, #tpu.memory_space<vmem>>, vector<8x512xf32>
    tpu.vector_store %arg8[%c0_56, %c17_57], %116 {strides = array<i32>} : memref<8x546xf32, #tpu.memory_space<vmem>>, vector<8x512xf32>,
    %c0_58 = arith.constant 0 : index
    %c0_59 = arith.constant 0 : index
    %118 = vector.load %arg8[%c0_58, %c0_59] : memref<8x546xf32, #tpu.memory_space<vmem>>, vector<8x512xf32>
    %119 = vector.broadcast %13 : vector<1x512xf32> to vector<8x512xf32>
    %120 = arith.mulf %118, %119 : vector<8x512xf32>
    %c0_60 = arith.constant 0 : index
    %c0_61 = arith.constant 0 : index
    %121 = vector.load %arg9[%c0_60, %c0_61] : memref<72x512xf32, #tpu.memory_space<vmem>>, vector<8x512xf32>
    tpu.vector_store %arg9[%c0_60, %c0_61], %120 {strides = array<i32>} : memref<72x512xf32, #tpu.memory_space<vmem>>, vector<8x512xf32>,
    %c0_62 = arith.constant 0 : index
    %c1_63 = arith.constant 1 : index
    %122 = vector.load %arg8[%c0_62, %c1_63] : memref<8x546xf32, #tpu.memory_space<vmem>>, vector<8x512xf32>
    %123 = vector.broadcast %17 : vector<1x512xf32> to vector<8x512xf32>
    %124 = arith.mulf %122, %123 : vector<8x512xf32>
    %c8_64 = arith.constant 8 : index
    %c0_65 = arith.constant 0 : index
    %125 = vector.load %arg9[%c8_64, %c0_65] : memref<72x512xf32, #tpu.memory_space<vmem>>, vector<8x512xf32>
    tpu.vector_store %arg9[%c8_64, %c0_65], %124 {strides = array<i32>} : memref<72x512xf32, #tpu.memory_space<vmem>>, vector<8x512xf32>,
    %c0_66 = arith.constant 0 : index
    %c2_67 = arith.constant 2 : index
    %126 = vector.load %arg8[%c0_66, %c2_67] : memref<8x546xf32, #tpu.memory_space<vmem>>, vector<8x512xf32>
    %127 = vector.broadcast %24 : vector<1x512xf32> to vector<8x512xf32>
    %128 = arith.mulf %126, %127 : vector<8x512xf32>
    %c16_68 = arith.constant 16 : index
    %c0_69 = arith.constant 0 : index
    %129 = vector.load %arg9[%c16_68, %c0_69] : memref<72x512xf32, #tpu.memory_space<vmem>>, vector<8x512xf32>
    tpu.vector_store %arg9[%c16_68, %c0_69], %128 {strides = array<i32>} : memref<72x512xf32, #tpu.memory_space<vmem>>, vector<8x512xf32>,
    %c0_70 = arith.constant 0 : index
    %c16_71 = arith.constant 16 : index
    %130 = vector.load %arg8[%c0_70, %c16_71] : memref<8x546xf32, #tpu.memory_space<vmem>>, vector<8x512xf32>
    %131 = vector.broadcast %28 : vector<1x512xf32> to vector<8x512xf32>
    %132 = arith.mulf %130, %131 : vector<8x512xf32>
    %c24_72 = arith.constant 24 : index
    %c0_73 = arith.constant 0 : index
    %133 = vector.load %arg9[%c24_72, %c0_73] : memref<72x512xf32, #tpu.memory_space<vmem>>, vector<8x512xf32>
    tpu.vector_store %arg9[%c24_72, %c0_73], %132 {strides = array<i32>} : memref<72x512xf32, #tpu.memory_space<vmem>>, vector<8x512xf32>,
    %c0_74 = arith.constant 0 : index
    %c17_75 = arith.constant 17 : index
    %134 = vector.load %arg8[%c0_74, %c17_75] : memref<8x546xf32, #tpu.memory_space<vmem>>, vector<8x512xf32>
    %c32_76 = arith.constant 32 : index
    %c0_77 = arith.constant 0 : index
    %135 = vector.load %arg9[%c32_76, %c0_77] : memref<72x512xf32, #tpu.memory_space<vmem>>, vector<8x512xf32>
    tpu.vector_store %arg9[%c32_76, %c0_77], %134 {strides = array<i32>} : memref<72x512xf32, #tpu.memory_space<vmem>>, vector<8x512xf32>,
    %c0_78 = arith.constant 0 : index
    %c18_79 = arith.constant 18 : index
    %136 = vector.load %arg8[%c0_78, %c18_79] : memref<8x546xf32, #tpu.memory_space<vmem>>, vector<8x512xf32>
    %137 = vector.broadcast %32 : vector<1x512xf32> to vector<8x512xf32>
    %138 = arith.mulf %136, %137 : vector<8x512xf32>
    %c40_80 = arith.constant 40 : index
    %c0_81 = arith.constant 0 : index
    %139 = vector.load %arg9[%c40_80, %c0_81] : memref<72x512xf32, #tpu.memory_space<vmem>>, vector<8x512xf32>
    tpu.vector_store %arg9[%c40_80, %c0_81], %138 {strides = array<i32>} : memref<72x512xf32, #tpu.memory_space<vmem>>, vector<8x512xf32>,
    %c0_82 = arith.constant 0 : index
    %c32_83 = arith.constant 32 : index
    %140 = vector.load %arg8[%c0_82, %c32_83] : memref<8x546xf32, #tpu.memory_space<vmem>>, vector<8x512xf32>
    %141 = vector.broadcast %39 : vector<1x512xf32> to vector<8x512xf32>
    %142 = arith.mulf %140, %141 : vector<8x512xf32>
    %c48_84 = arith.constant 48 : index
    %c0_85 = arith.constant 0 : index
    %143 = vector.load %arg9[%c48_84, %c0_85] : memref<72x512xf32, #tpu.memory_space<vmem>>, vector<8x512xf32>
    tpu.vector_store %arg9[%c48_84, %c0_85], %142 {strides = array<i32>} : memref<72x512xf32, #tpu.memory_space<vmem>>, vector<8x512xf32>,
    %c0_86 = arith.constant 0 : index
    %c33_87 = arith.constant 33 : index
    %144 = vector.load %arg8[%c0_86, %c33_87] : memref<8x546xf32, #tpu.memory_space<vmem>>, vector<8x512xf32>
    %145 = vector.broadcast %43 : vector<1x512xf32> to vector<8x512xf32>
    %146 = arith.mulf %144, %145 : vector<8x512xf32>
    %c56_88 = arith.constant 56 : index
    %c0_89 = arith.constant 0 : index
    %147 = vector.load %arg9[%c56_88, %c0_89] : memref<72x512xf32, #tpu.memory_space<vmem>>, vector<8x512xf32>
    tpu.vector_store %arg9[%c56_88, %c0_89], %146 {strides = array<i32>} : memref<72x512xf32, #tpu.memory_space<vmem>>, vector<8x512xf32>,
    %c0_90 = arith.constant 0 : index
    %c34_91 = arith.constant 34 : index
    %148 = vector.load %arg8[%c0_90, %c34_91] : memref<8x546xf32, #tpu.memory_space<vmem>>, vector<8x512xf32>
    %149 = vector.broadcast %50 : vector<1x512xf32> to vector<8x512xf32>
    %150 = arith.mulf %148, %149 : vector<8x512xf32>
    %c64_92 = arith.constant 64 : index
    %c0_93 = arith.constant 0 : index
    %151 = vector.load %arg9[%c64_92, %c0_93] : memref<72x512xf32, #tpu.memory_space<vmem>>, vector<8x512xf32>
    tpu.vector_store %arg9[%c64_92, %c0_93], %150 {strides = array<i32>} : memref<72x512xf32, #tpu.memory_space<vmem>>, vector<8x512xf32>,
    %c0_94 = arith.constant 0 : index
    %c0_95 = arith.constant 0 : index
    %152 = vector.load %arg4[%c0_94, %c0_95] : memref<8x72xf32, #tpu.memory_space<vmem>>, vector<8x72xf32>
    %c0_96 = arith.constant 0 : index
    %c0_97 = arith.constant 0 : index
    %153 = vector.load %arg9[%c0_96, %c0_97] : memref<72x512xf32, #tpu.memory_space<vmem>>, vector<72x512xf32>
    %cst_98 = arith.constant dense<0.000000e+00> : vector<8x512xf32>
    %154 = tpu.matmul %152, %153, %cst_98 {dimension_numbers = #tpu.dot_dimension_numbers<[1], [0], [0], [1], [0, 0, 1, 1], [], []>} : vector<8x72xf32>, vector<72x512xf32>, vector<8x512xf32> -> vector<8x512xf32>
    %cst_99 = arith.constant dense<0.000000e+00> : vector<8xf32>
    %155 = vector.multi_reduction <add>, %154, %cst_99 [1] : vector<8x512xf32> to vector<8xf32>
    %156 = vector.shape_cast %155 : vector<8xf32> to vector<8x1xf32>
    %cst_100 = arith.constant 0.001953125 : f32
    %157 = vector.broadcast %cst_100 : f32 to vector<8x1xf32>
    %158 = arith.mulf %156, %157 : vector<8x1xf32>
    %159 = vector.broadcast %158 : vector<8x1xf32> to vector<8x512xf32>
    %160 = arith.subf %154, %159 : vector<8x512xf32>
    %161 = arith.mulf %160, %160 : vector<8x512xf32>
    %cst_101 = arith.constant dense<0.000000e+00> : vector<8xf32>
    %162 = vector.multi_reduction <add>, %161, %cst_101 [1] : vector<8x512xf32> to vector<8xf32>
    %163 = vector.shape_cast %162 : vector<8xf32> to vector<8x1xf32>
    %cst_102 = arith.constant 0.001953125 : f32
    %164 = vector.broadcast %cst_102 : f32 to vector<8x1xf32>
    %165 = arith.mulf %163, %164 : vector<8x1xf32>
    %cst_103 = arith.constant 9.99999974E-6 : f32
    %166 = vector.broadcast %cst_103 : f32 to vector<8x1xf32>
    %167 = arith.addf %165, %166 : vector<8x1xf32>
    %168 = math.rsqrt %167 : vector<8x1xf32>
    %c0_104 = arith.constant 0 : index
    %c0_105 = arith.constant 0 : index
    %169 = vector.load %arg5[%c0_104, %c0_105] : memref<8x1xf32, #tpu.memory_space<vmem>>, vector<8x1xf32>
    %170 = arith.mulf %168, %169 : vector<8x1xf32>
    %171 = vector.broadcast %170 : vector<8x1xf32> to vector<8x512xf32>
    %172 = arith.mulf %160, %171 : vector<8x512xf32>
    %c0_106 = arith.constant 0 : index
    %c0_107 = arith.constant 0 : index
    %173 = vector.load %arg6[%c0_106, %c0_107] : memref<8x1xf32, #tpu.memory_space<vmem>>, vector<8x1xf32>
    %174 = vector.broadcast %173 : vector<8x1xf32> to vector<8x512xf32>
    %175 = arith.addf %172, %174 : vector<8x512xf32>
    %176 = arith.addf %175, %55 : vector<8x512xf32>
    %cst_108 = arith.constant 0.000000e+00 : f32
    %177 = vector.broadcast %cst_108 : f32 to vector<8x512xf32>
    %178 = arith.maximumf %176, %177 : vector<8x512xf32>
    %c0_109 = arith.constant 0 : index
    %c0_110 = arith.constant 0 : index
    %179 = vector.load %arg7[%c0_109, %c0_110] : memref<8x512xf32, #tpu.memory_space<vmem>>, vector<8x512xf32>
    tpu.vector_store %arg7[%c0_109, %c0_110], %178 {strides = array<i32>} : memref<8x512xf32, #tpu.memory_space<vmem>>, vector<8x512xf32>,
    return
  }
}

</mosaic_0001>

<llo_original>
// kernel: residual_block_pallas.1
$region0: #{residual_block_pallas.1}
  #allocation0 [shape = 'u32[]', space=smem, size = 0x4, offset = 0x4, fixed_abs, tag = 'smem constant byte address 0x4 - core index']
  #allocation1 [shape = 'u32[72,128]{1,0:T(1,128)}', space=vmem, size = 0x9000, scoped, tag = 'internal scratch']
  #allocation2 [shape = 'f32[8,546]{1,0:T(8,128)}', space=vmem, size = 0x5000, scoped, tag = 'scratch operand']
  #allocation3 [shape = 'f32[72,512]{1,0:T(8,128)}', space=vmem, size = 0x24000, scoped, tag = 'scratch operand']
  %s0 = inlined_call_operand.vmem [shape: f32[8,512], index: 0, kind: input, shape index: {}]
  %s1 = inlined_call_operand.vmem [shape: f32[8,72], index: 1, kind: input, shape index: {}]
  %s2 = inlined_call_operand.vmem [shape: f32[8,1], index: 2, kind: input, shape index: {}]
  %s3 = inlined_call_operand.vmem [shape: f32[8,1], index: 3, kind: input, shape index: {}]
  %s4 = inlined_call_operand.vmem [shape: f32[8,72], index: 4, kind: input, shape index: {}]
  %s5 = inlined_call_operand.vmem [shape: f32[8,1], index: 5, kind: input, shape index: {}]
  %s6 = inlined_call_operand.vmem [shape: f32[8,1], index: 6, kind: input, shape index: {}]
  %s7 = inlined_call_operand.vmem [shape: f32[8,512], index: 7, kind: output, shape index: {}]
  %s8 = sld [smem:[#allocation0]]
  $region38: #{residual_block_pallas.1} parent=0
    _
  %s10 = ssub.s32 1, %s8
  %s11 = scalar_select 0, %s10, %s8
  // Predicated region
  $region2: #{residual_block_pallas.1} parent=0 // pred_check
    _
  $region3: #{residual_block_pallas.1} parent=0 // pred_check_branch
    %13 = sbr.rel (0) target = $region5
  $region4: #{residual_block_pallas.1} parent=0 // pred_region
    _
  $region5: #{residual_block_pallas.1} parent=0 // pred_fallthru
    _
  // Predicated region
  $region6: #{residual_block_pallas.1} parent=0 // pred_check
    _
  $region7: #{residual_block_pallas.1} parent=0 // pred_check_branch
    %15 = sbr.rel (0) target = $region9
  $region8: #{residual_block_pallas.1} parent=0 // pred_region
    _
  $region9: #{residual_block_pallas.1} parent=0 // pred_fallthru
    _
  // Predicated region
  $region10: #{residual_block_pallas.1} parent=0 // pred_check
    _
  $region11: #{residual_block_pallas.1} parent=0 // pred_check_branch
    %17 = sbr.rel (0) target = $region13
  $region12: #{residual_block_pallas.1} parent=0 // pred_region
    _
  $region13: #{residual_block_pallas.1} parent=0 // pred_fallthru
    _
  // Predicated region
  $region14: #{residual_block_pallas.1} parent=0 // pred_check
    _
  $region15: #{residual_block_pallas.1} parent=0 // pred_check_branch
    %19 = sbr.rel (0) target = $region17
  $region16: #{residual_block_pallas.1} parent=0 // pred_region
    _
  $region17: #{residual_block_pallas.1} parent=0 // pred_fallthru
    _
  // Predicated region
  $region18: #{residual_block_pallas.1} parent=0 // pred_check
    _
  $region19: #{residual_block_pallas.1} parent=0 // pred_check_branch
    %21 = sbr.rel (0) target = $region21
  $region20: #{residual_block_pallas.1} parent=0 // pred_region
    _
  $region21: #{residual_block_pallas.1} parent=0 // pred_fallthru
    _
  // Predicated region
  $region22: #{residual_block_pallas.1} parent=0 // pred_check
    _
  $region23: #{residual_block_pallas.1} parent=0 // pred_check_branch
    %23 = sbr.rel (0) target = $region25
  $region24: #{residual_block_pallas.1} parent=0 // pred_region
    _
  $region25: #{residual_block_pallas.1} parent=0 // pred_fallthru
    _
  // Predicated region
  $region26: #{residual_block_pallas.1} parent=0 // pred_check
    _
  $region27: #{residual_block_pallas.1} parent=0 // pred_check_branch
    %25 = sbr.rel (0) target = $region29
  $region28: #{residual_block_pallas.1} parent=0 // pred_region
    _
  $region29: #{residual_block_pallas.1} parent=0 // pred_fallthru
    _
  %v26 = vlaneseq
  %v27 = vand.u32 %v26, 127
  %v28 = vadd.s32 %v27, 128
  %v29 = vadd.s32 %v27, 256
  %v30 = vadd.s32 %v27, 384
  %v31 = vand.u32 %v27, 15
  %v32 = vand.u32 %v28, 15
  %v33 = vand.u32 %v29, 15
  %v34 = vand.u32 %v30, 15
  %v35 = vshra.s32 %v27, 4
  %v36 = vshra.s32 %v28, 4
  %v37 = vshra.s32 %v29, 4
  %v38 = vshra.s32 %v30, 4
  %v39 = vand.u32 %v35, 15
  %v40 = vand.u32 %v36, 15
  %v41 = vand.u32 %v37, 15
  %v42 = vand.u32 %v38, 15
  %vm43 = vcmp.ge.s32.totalorder %v39, 1
  %vm44 = vcmp.ge.s32.totalorder %v40, 1
  %vm45 = vcmp.ge.s32.totalorder %v41, 1
  %vm46 = vcmp.ge.s32.totalorder %v42, 1
  %vm47 = vcmp.ge.s32.totalorder %v31, 1
  %vm48 = vcmp.ge.s32.totalorder %v32, 1
  %vm49 = vcmp.ge.s32.totalorder %v33, 1
  %vm50 = vcmp.ge.s32.totalorder %v34, 1
  %vm51 = vmand %vm43, %vm47
  %vm52 = vmand %vm44, %vm48
  %vm53 = vmand %vm45, %vm49
  %vm54 = vmand %vm46, %vm50
  %v55 = vsel %vm51, 1, 0
  %v56 = vsel %vm52, 1, 0
  %v57 = vsel %vm53, 1, 0
  %v58 = vsel %vm54, 1, 0
  %v59 = vcvt.s32.f32 %v55
  %v60 = vcvt.s32.f32 %v56
  %v61 = vcvt.s32.f32 %v57
  %v62 = vcvt.s32.f32 %v58
  %v63 = vsel %vm43, 1, 0
  %v64 = vsel %vm44, 1, 0
  %v65 = vsel %vm45, 1, 0
  %v66 = vsel %vm46, 1, 0
  %v67 = vcvt.s32.f32 %v63
  %v68 = vcvt.s32.f32 %v64
  %v69 = vcvt.s32.f32 %v65
  %v70 = vcvt.s32.f32 %v66
  %vm71 = vcmp.lt.s32.totalorder %v31, 15
  %vm72 = vcmp.lt.s32.totalorder %v32, 15
  %vm73 = vcmp.lt.s32.totalorder %v33, 15
  %vm74 = vcmp.lt.s32.totalorder %v34, 15
  %vm75 = vmand %vm43, %vm71
  %vm76 = vmand %vm44, %vm72
  %vm77 = vmand %vm45, %vm73
  %vm78 = vmand %vm46, %vm74
  %v79 = vsel %vm75, 1, 0
  %v80 = vsel %vm76, 1, 0
  %v81 = vsel %vm77, 1, 0
  %v82 = vsel %vm78, 1, 0
  %v83 = vcvt.s32.f32 %v79
  %v84 = vcvt.s32.f32 %v80
  %v85 = vcvt.s32.f32 %v81
  %v86 = vcvt.s32.f32 %v82
  %v87 = vsel %vm47, 1, 0
  %v88 = vsel %vm48, 1, 0
  %v89 = vsel %vm49, 1, 0
  %v90 = vsel %vm50, 1, 0
  %v91 = vcvt.s32.f32 %v87
  %v92 = vcvt.s32.f32 %v88
  %v93 = vcvt.s32.f32 %v89
  %v94 = vcvt.s32.f32 %v90
  %v95 = vsel %vm71, 1, 0
  %v96 = vsel %vm72, 1, 0
  %v97 = vsel %vm73, 1, 0
  %v98 = vsel %vm74, 1, 0
  %v99 = vcvt.s32.f32 %v95
  %v100 = vcvt.s32.f32 %v96
  %v101 = vcvt.s32.f32 %v97
  %v102 = vcvt.s32.f32 %v98
  %vm103 = vcmp.lt.s32.totalorder %v39, 15
  %vm104 = vcmp.lt.s32.totalorder %v40, 15
  %vm105 = vcmp.lt.s32.totalorder %v41, 15
  %vm106 = vcmp.lt.s32.totalorder %v42, 15
  %vm107 = vmand %vm103, %vm47
  %vm108 = vmand %vm104, %vm48
  %vm109 = vmand %vm105, %vm49
  %vm110 = vmand %vm106, %vm50
  %v111 = vsel %vm107, 1, 0
  %v112 = vsel %vm108, 1, 0
  %v113 = vsel %vm109, 1, 0
  %v114 = vsel %vm110, 1, 0
  %v115 = vcvt.s32.f32 %v111
  %v116 = vcvt.s32.f32 %v112
  %v117 = vcvt.s32.f32 %v113
  %v118 = vcvt.s32.f32 %v114
  %v119 = vsel %vm103, 1, 0
  %v120 = vsel %vm104, 1, 0
  %v121 = vsel %vm105, 1, 0
  %v122 = vsel %vm106, 1, 0
  %v123 = vcvt.s32.f32 %v119
  %v124 = vcvt.s32.f32 %v120
  %v125 = vcvt.s32.f32 %v121
  %v126 = vcvt.s32.f32 %v122
  %vm127 = vmand %vm103, %vm71
  %vm128 = vmand %vm104, %vm72
  %vm129 = vmand %vm105, %vm73
  %vm130 = vmand %vm106, %vm74
  %v131 = vsel %vm127, 1, 0
  %v132 = vsel %vm128, 1, 0
  %v133 = vsel %vm129, 1, 0
  %v134 = vsel %vm130, 1, 0
  %v135 = vcvt.s32.f32 %v131
  %v136 = vcvt.s32.f32 %v132
  %v137 = vcvt.s32.f32 %v133
  %v138 = vcvt.s32.f32 %v134
  %vm139 = vcmask 138240
  %140 = vst.msk [vmem:[#allocation2] sm:$0xff] %vm139, 0.0
  %vm141 = vcmask 277640
  %142 = vst.msk [vmem:[#allocation2 + $0x20] sm:$0xff] %vm141, 0.0
  %v143 = vld [vmem:[%s0] sm:$0xff]
  %v144 = vld [vmem:[%s0 + $0x8] sm:$0xff]
  %v145 = vld [vmem:[%s0 + $0x10] sm:$0xff]
  %v146 = vld [vmem:[%s0 + $0x18] sm:$0xff]
  %151 = vrot.lane.b32.xlu0 %v143, 17
  %v152 = vpop.permute.xlu0 %151
  %153 = vrot.lane.b32.xlu0 %v144, 17
  %v154 = vpop.permute.xlu0 %153
  %155 = vrot.lane.b32.xlu0 %v145, 17
  %v156 = vpop.permute.xlu0 %155
  %157 = vrot.lane.b32.xlu0 %v146, 17
  %v158 = vpop.permute.xlu0 %157
  %v159 = vsel %vm139, %v152, %v154
  %v160 = vsel %vm139, %v154, %v156
  %v161 = vsel %vm139, %v156, %v158
  %vm167 = vcmask 1047688
  %168 = vst.msk [vmem:[#allocation2] sm:$0xff] %vm167, %v152
  %169 = vst [vmem:[#allocation2 + $0x8] sm:$0xff] %v159
  %170 = vst [vmem:[#allocation2 + $0x10] sm:$0xff] %v160
  %171 = vst [vmem:[#allocation2 + $0x18] sm:$0xff] %v161
  %172 = vst.msk [vmem:[#allocation2 + $0x20] sm:$0xff] %vm139, %v158
  %v173 = vld [vmem:[#allocation2] sm:$0xff]
  %v174 = vld [vmem:[#allocation2 + $0x8] sm:$0xff]
  %v175 = vld [vmem:[#allocation2 + $0x10] sm:$0xff]
  %v176 = vld [vmem:[#allocation2 + $0x18] sm:$0xff]
  %v177 = vmul.f32 %v173, %v59
  %v178 = vmul.f32 %v174, %v60
  %v179 = vmul.f32 %v175, %v61
  %v180 = vmul.f32 %v176, %v62
  %181 = vst [vmem:[#allocation3] sm:$0xff] %v177
  %182 = vst [vmem:[#allocation3 + $0x8] sm:$0xff] %v178
  %183 = vst [vmem:[#allocation3 + $0x10] sm:$0xff] %v179
  %184 = vst [vmem:[#allocation3 + $0x18] sm:$0xff] %v180
  %v185 = vld [vmem:[#allocation2] sm:$0xff]
  %v186 = vld [vmem:[#allocation2 + $0x8] sm:$0xff]
  %v187 = vld [vmem:[#allocation2 + $0x10] sm:$0xff]
  %v188 = vld [vmem:[#allocation2 + $0x18] sm:$0xff]
  %v189 = vld [vmem:[#allocation2 + $0x20] sm:$0xff]
  %194 = vrot.lane.b32.xlu0 %v67, 1
  %v195 = vpop.permute.xlu0 %194
  %196 = vrot.lane.b32.xlu0 %v68, 1
  %v197 = vpop.permute.xlu0 %196
  %198 = vrot.lane.b32.xlu0 %v69, 1
  %v199 = vpop.permute.xlu0 %198
  %200 = vrot.lane.b32.xlu0 %v70, 1
  %v201 = vpop.permute.xlu0 %200
  %vm202 = vcmask 7168
  %v203 = vsel %vm202, %v195, %v197
  %v204 = vsel %vm202, %v197, %v199
  %v205 = vsel %vm202, %v199, %v201
  %v211 = vmul.f32 %v185, %v195
  %v212 = vmul.f32 %v186, %v203
  %v213 = vmul.f32 %v187, %v204
  %v214 = vmul.f32 %v188, %v205
  %v215 = vmul.f32 %v189, %v201
  %221 = vrot.lane.b32.xlu0 %v211, 127
  %v222 = vpop.permute.xlu0 %221
  %223 = vrot.lane.b32.xlu0 %v212, 127
  %v224 = vpop.permute.xlu0 %223
  %225 = vrot.lane.b32.xlu0 %v213, 127
  %v226 = vpop.permute.xlu0 %225
  %227 = vrot.lane.b32.xlu0 %v214, 127
  %v228 = vpop.permute.xlu0 %227
  %229 = vrot.lane.b32.xlu0 %v215, 127
  %v230 = vpop.permute.xlu0 %229
  %vm231 = vcmask 1039360
  %v232 = vsel %vm231, %v222, %v224
  %v233 = vsel %vm231, %v224, %v226
  %v234 = vsel %vm231, %v226, %v228
  %v235 = vsel %vm231, %v228, %v230
  %240 = vst [vmem:[#allocation3 + $0x20] sm:$0xff] %v232
  %241 = vst [vmem:[#allocation3 + $0x28] sm:$0xff] %v233
  %242 = vst [vmem:[#allocation3 + $0x30] sm:$0xff] %v234
  %243 = vst [vmem:[#allocation3 + $0x38] sm:$0xff] %v235
  %v244 = vld [vmem:[#allocation2] sm:$0xff]
  %v245 = vld [vmem:[#allocation2 + $0x8] sm:$0xff]
  %v246 = vld [vmem:[#allocation2 + $0x10] sm:$0xff]
  %v247 = vld [vmem:[#allocation2 + $0x18] sm:$0xff]
  %v248 = vld [vmem:[#allocation2 + $0x20] sm:$0xff]
  %253 = vrot.lane.b32.xlu0 %v83, 2
  %v254 = vpop.permute.xlu0 %253
  %255 = vrot.lane.b32.xlu0 %v84, 2
  %v256 = vpop.permute.xlu0 %255
  %257 = vrot.lane.b32.xlu0 %v85, 2
  %v258 = vpop.permute.xlu0 %257
  %259 = vrot.lane.b32.xlu0 %v86, 2
  %v260 = vpop.permute.xlu0 %259
  %vm261 = vcmask 15360
  %v262 = vsel %vm261, %v254, %v256
  %v263 = vsel %vm261, %v256, %v258
  %v264 = vsel %vm261, %v258, %v260
  %v270 = vmul.f32 %v244, %v254
  %v271 = vmul.f32 %v245, %v262
  %v272 = vmul.f32 %v246, %v263
  %v273 = vmul.f32 %v247, %v264
  %v274 = vmul.f32 %v248, %v260
  %280 = vrot.lane.b32.xlu0 %v270, 126
  %v281 = vpop.permute.xlu0 %280
  %282 = vrot.lane.b32.xlu0 %v271, 126
  %v283 = vpop.permute.xlu0 %282
  %284 = vrot.lane.b32.xlu0 %v272, 126
  %v285 = vpop.permute.xlu0 %284
  %286 = vrot.lane.b32.xlu0 %v273, 126
  %v287 = vpop.permute.xlu0 %286
  %288 = vrot.lane.b32.xlu0 %v274, 126
  %v289 = vpop.permute.xlu0 %288
  %vm290 = vcmask 1031168
  %v291 = vsel %vm290, %v281, %v283
  %v292 = vsel %vm290, %v283, %v285
  %v293 = vsel %vm290, %v285, %v287
  %v294 = vsel %vm290, %v287, %v289
  %299 = vst [vmem:[#allocation3 + $0x40] sm:$0xff] %v291
  %300 = vst [vmem:[#allocation3 + $0x48] sm:$0xff] %v292
  %301 = vst [vmem:[#allocation3 + $0x50] sm:$0xff] %v293
  %302 = vst [vmem:[#allocation3 + $0x58] sm:$0xff] %v294
  %v303 = vld [vmem:[#allocation2] sm:$0xff]
  %v304 = vld [vmem:[#allocation2 + $0x8] sm:$0xff]
  %v305 = vld [vmem:[#allocation2 + $0x10] sm:$0xff]
  %v306 = vld [vmem:[#allocation2 + $0x18] sm:$0xff]
  %v307 = vld [vmem:[#allocation2 + $0x20] sm:$0xff]
  %312 = vrot.lane.b32.xlu0 %v91, 16
  %v313 = vpop.permute.xlu0 %312
  %314 = vrot.lane.b32.xlu0 %v92, 16
  %v315 = vpop.permute.xlu0 %314
  %316 = vrot.lane.b32.xlu0 %v93, 16
  %v317 = vpop.permute.xlu0 %316
  %318 = vrot.lane.b32.xlu0 %v94, 16
  %v319 = vpop.permute.xlu0 %318
  %vm320 = vcmask 130048
  %v321 = vsel %vm320, %v313, %v315
  %v322 = vsel %vm320, %v315, %v317
  %v323 = vsel %vm320, %v317, %v319
  %v329 = vmul.f32 %v303, %v313
  %v330 = vmul.f32 %v304, %v321
  %v331 = vmul.f32 %v305, %v322
  %v332 = vmul.f32 %v306, %v323
  %v333 = vmul.f32 %v307, %v319
  %339 = vrot.lane.b32.xlu0 %v329, 112
  %v340 = vpop.permute.xlu0 %339
  %341 = vrot.lane.b32.xlu0 %v330, 112
  %v342 = vpop.permute.xlu0 %341
  %343 = vrot.lane.b32.xlu0 %v331, 112
  %v344 = vpop.permute.xlu0 %343
  %345 = vrot.lane.b32.xlu0 %v332, 112
  %v346 = vpop.permute.xlu0 %345
  %347 = vrot.lane.b32.xlu0 %v333, 112
  %v348 = vpop.permute.xlu0 %347
  %vm349 = vcmask 916480
  %v350 = vsel %vm349, %v340, %v342
  %v351 = vsel %vm349, %v342, %v344
  %v352 = vsel %vm349, %v344, %v346
  %v353 = vsel %vm349, %v346, %v348
  %358 = vst [vmem:[#allocation3 + $0x60] sm:$0xff] %v350
  %359 = vst [vmem:[#allocation3 + $0x68] sm:$0xff] %v351
  %360 = vst [vmem:[#allocation3 + $0x70] sm:$0xff] %v352
  %361 = vst [vmem:[#allocation3 + $0x78] sm:$0xff] %v353
  %v362 = vld [vmem:[#allocation2] sm:$0xff]
  %v363 = vld [vmem:[#allocation2 + $0x8] sm:$0xff]
  %v364 = vld [vmem:[#allocation2 + $0x10] sm:$0xff]
  %v365 = vld [vmem:[#allocation2 + $0x18] sm:$0xff]
  %v366 = vld [vmem:[#allocation2 + $0x20] sm:$0xff]
  %372 = vrot.lane.b32.xlu0 %v362, 111
  %v373 = vpop.permute.xlu0 %372
  %374 = vrot.lane.b32.xlu0 %v363, 111
  %v375 = vpop.permute.xlu0 %374
  %376 = vrot.lane.b32.xlu0 %v364, 111
  %v377 = vpop.permute.xlu0 %376
  %378 = vrot.lane.b32.xlu0 %v365, 111
  %v379 = vpop.permute.xlu0 %378
  %380 = vrot.lane.b32.xlu0 %v366, 111
  %v381 = vpop.permute.xlu0 %380
  %vm382 = vcmask 908288
  %v383 = vsel %vm382, %v373, %v375
  %v384 = vsel %vm382, %v375, %v377
  %v385 = vsel %vm382, %v377, %v379
  %v386 = vsel %vm382, %v379, %v381
  %391 = vst [vmem:[#allocation3 + $0x80] sm:$0xff] %v383
  %392 = vst [vmem:[#allocation3 + $0x88] sm:$0xff] %v384
  %393 = vst [vmem:[#allocation3 + $0x90] sm:$0xff] %v385
  %394 = vst [vmem:[#allocation3 + $0x98] sm:$0xff] %v386
  %v395 = vld [vmem:[#allocation2] sm:$0xff]
  %v396 = vld [vmem:[#allocation2 + $0x8] sm:$0xff]
  %v397 = vld [vmem:[#allocation2 + $0x10] sm:$0xff]
  %v398 = vld [vmem:[#allocation2 + $0x18] sm:$0xff]
  %v399 = vld [vmem:[#allocation2 + $0x20] sm:$0xff]
  %404 = vrot.lane.b32.xlu0 %v99, 18
  %v405 = vpop.permute.xlu0 %404
  %406 = vrot.lane.b32.xlu0 %v100, 18
  %v407 = vpop.permute.xlu0 %406
  %408 = vrot.lane.b32.xlu0 %v101, 18
  %v409 = vpop.permute.xlu0 %408
  %410 = vrot.lane.b32.xlu0 %v102, 18
  %v411 = vpop.permute.xlu0 %410
  %vm412 = vcmask 146432
  %v413 = vsel %vm412, %v405, %v407
  %v414 = vsel %vm412, %v407, %v409
  %v415 = vsel %vm412, %v409, %v411
  %v421 = vmul.f32 %v395, %v405
  %v422 = vmul.f32 %v396, %v413
  %v423 = vmul.f32 %v397, %v414
  %v424 = vmul.f32 %v398, %v415
  %v425 = vmul.f32 %v399, %v411
  %431 = vrot.lane.b32.xlu0 %v421, 110
  %v432 = vpop.permute.xlu0 %431
  %433 = vrot.lane.b32.xlu0 %v422, 110
  %v434 = vpop.permute.xlu0 %433
  %435 = vrot.lane.b32.xlu0 %v423, 110
  %v436 = vpop.permute.xlu0 %435
  %437 = vrot.lane.b32.xlu0 %v424, 110
  %v438 = vpop.permute.xlu0 %437
  %439 = vrot.lane.b32.xlu0 %v425, 110
  %v440 = vpop.permute.xlu0 %439
  %vm441 = vcmask 900096
  %v442 = vsel %vm441, %v432, %v434
  %v443 = vsel %vm441, %v434, %v436
  %v444 = vsel %vm441, %v436, %v438
  %v445 = vsel %vm441, %v438, %v440
  %450 = vst [vmem:[#allocation3 + $0xa0] sm:$0xff] %v442
  %451 = vst [vmem:[#allocation3 + $0xa8] sm:$0xff] %v443
  %452 = vst [vmem:[#allocation3 + $0xb0] sm:$0xff] %v444
  %453 = vst [vmem:[#allocation3 + $0xb8] sm:$0xff] %v445
  %v454 = vld [vmem:[#allocation2] sm:$0xff]
  %v455 = vld [vmem:[#allocation2 + $0x8] sm:$0xff]
  %v456 = vld [vmem:[#allocation2 + $0x10] sm:$0xff]
  %v457 = vld [vmem:[#allocation2 + $0x18] sm:$0xff]
  %v458 = vld [vmem:[#allocation2 + $0x20] sm:$0xff]
  %463 = vrot.lane.b32.xlu0 %v115, 32
  %v464 = vpop.permute.xlu0 %463
  %465 = vrot.lane.b32.xlu0 %v116, 32
  %v466 = vpop.permute.xlu0 %465
  %467 = vrot.lane.b32.xlu0 %v117, 32
  %v468 = vpop.permute.xlu0 %467
  %469 = vrot.lane.b32.xlu0 %v118, 32
  %v470 = vpop.permute.xlu0 %469
  %vm471 = vcmask 261120
  %v472 = vsel %vm471, %v464, %v466
  %v473 = vsel %vm471, %v466, %v468
  %v474 = vsel %vm471, %v468, %v470
  %v480 = vmul.f32 %v454, %v464
  %v481 = vmul.f32 %v455, %v472
  %v482 = vmul.f32 %v456, %v473
  %v483 = vmul.f32 %v457, %v474
  %v484 = vmul.f32 %v458, %v470
  %490 = vrot.lane.b32.xlu0 %v480, 96
  %v491 = vpop.permute.xlu0 %490
  %492 = vrot.lane.b32.xlu0 %v481, 96
  %v493 = vpop.permute.xlu0 %492
  %494 = vrot.lane.b32.xlu0 %v482, 96
  %v495 = vpop.permute.xlu0 %494
  %496 = vrot.lane.b32.xlu0 %v483, 96
  %v497 = vpop.permute.xlu0 %496
  %498 = vrot.lane.b32.xlu0 %v484, 96
  %v499 = vpop.permute.xlu0 %498
  %vm500 = vcmask 785408
  %v501 = vsel %vm500, %v491, %v493
  %v502 = vsel %vm500, %v493, %v495
  %v503 = vsel %vm500, %v495, %v497
  %v504 = vsel %vm500, %v497, %v499
  %509 = vst [vmem:[#allocation3 + $0xc0] sm:$0xff] %v501
  %510 = vst [vmem:[#allocation3 + $0xc8] sm:$0xff] %v502
  %511 = vst [vmem:[#allocation3 + $0xd0] sm:$0xff] %v503
  %512 = vst [vmem:[#allocation3 + $0xd8] sm:$0xff] %v504
  %v513 = vld [vmem:[#allocation2] sm:$0xff]
  %v514 = vld [vmem:[#allocation2 + $0x8] sm:$0xff]
  %v515 = vld [vmem:[#allocation2 + $0x10] sm:$0xff]
  %v516 = vld [vmem:[#allocation2 + $0x18] sm:$0xff]
  %v517 = vld [vmem:[#allocation2 + $0x20] sm:$0xff]
  %522 = vrot.lane.b32.xlu0 %v123, 33
  %v523 = vpop.permute.xlu0 %522
  %524 = vrot.lane.b32.xlu0 %v124, 33
  %v525 = vpop.permute.xlu0 %524
  %526 = vrot.lane.b32.xlu0 %v125, 33
  %v527 = vpop.permute.xlu0 %526
  %528 = vrot.lane.b32.xlu0 %v126, 33
  %v529 = vpop.permute.xlu0 %528
  %vm530 = vcmask 269312
  %v531 = vsel %vm530, %v523, %v525
  %v532 = vsel %vm530, %v525, %v527
  %v533 = vsel %vm530, %v527, %v529
  %v539 = vmul.f32 %v513, %v523
  %v540 = vmul.f32 %v514, %v531
  %v541 = vmul.f32 %v515, %v532
  %v542 = vmul.f32 %v516, %v533
  %v543 = vmul.f32 %v517, %v529
  %549 = vrot.lane.b32.xlu0 %v539, 95
  %v550 = vpop.permute.xlu0 %549
  %551 = vrot.lane.b32.xlu0 %v540, 95
  %v552 = vpop.permute.xlu0 %551
  %553 = vrot.lane.b32.xlu0 %v541, 95
  %v554 = vpop.permute.xlu0 %553
  %555 = vrot.lane.b32.xlu0 %v542, 95
  %v556 = vpop.permute.xlu0 %555
  %557 = vrot.lane.b32.xlu0 %v543, 95
  %v558 = vpop.permute.xlu0 %557
  %vm559 = vcmask 777216
  %v560 = vsel %vm559, %v550, %v552
  %v561 = vsel %vm559, %v552, %v554
  %v562 = vsel %vm559, %v554, %v556
  %v563 = vsel %vm559, %v556, %v558
  %568 = vst [vmem:[#allocation3 + $0xe0] sm:$0xff] %v560
  %569 = vst [vmem:[#allocation3 + $0xe8] sm:$0xff] %v561
  %570 = vst [vmem:[#allocation3 + $0xf0] sm:$0xff] %v562
  %571 = vst [vmem:[#allocation3 + $0xf8] sm:$0xff] %v563
  %v572 = vld [vmem:[#allocation2] sm:$0xff]
  %v573 = vld [vmem:[#allocation2 + $0x8] sm:$0xff]
  %v574 = vld [vmem:[#allocation2 + $0x10] sm:$0xff]
  %v575 = vld [vmem:[#allocation2 + $0x18] sm:$0xff]
  %v576 = vld [vmem:[#allocation2 + $0x20] sm:$0xff]
  %581 = vrot.lane.b32.xlu0 %v135, 34
  %v582 = vpop.permute.xlu0 %581
  %583 = vrot.lane.b32.xlu0 %v136, 34
  %v584 = vpop.permute.xlu0 %583
  %585 = vrot.lane.b32.xlu0 %v137, 34
  %v586 = vpop.permute.xlu0 %585
  %587 = vrot.lane.b32.xlu0 %v138, 34
  %v588 = vpop.permute.xlu0 %587
  %vm589 = vcmask 277504
  %v590 = vsel %vm589, %v582, %v584
  %v591 = vsel %vm589, %v584, %v586
  %v592 = vsel %vm589, %v586, %v588
  %v598 = vmul.f32 %v572, %v582
  %v599 = vmul.f32 %v573, %v590
  %v600 = vmul.f32 %v574, %v591
  %v601 = vmul.f32 %v575, %v592
  %v602 = vmul.f32 %v576, %v588
  %608 = vrot.lane.b32.xlu0 %v598, 94
  %v609 = vpop.permute.xlu0 %608
  %610 = vrot.lane.b32.xlu0 %v599, 94
  %v611 = vpop.permute.xlu0 %610
  %612 = vrot.lane.b32.xlu0 %v600, 94
  %v613 = vpop.permute.xlu0 %612
  %614 = vrot.lane.b32.xlu0 %v601, 94
  %v615 = vpop.permute.xlu0 %614
  %616 = vrot.lane.b32.xlu0 %v602, 94
  %v617 = vpop.permute.xlu0 %616
  %vm618 = vcmask 769024
  %v619 = vsel %vm618, %v609, %v611
  %v620 = vsel %vm618, %v611, %v613
  %v621 = vsel %vm618, %v613, %v615
  %v622 = vsel %vm618, %v615, %v617
  %627 = vst [vmem:[#allocation3 + $0x100] sm:$0xff] %v619
  %628 = vst [vmem:[#allocation3 + $0x108] sm:$0xff] %v620
  %629 = vst [vmem:[#allocation3 + $0x110] sm:$0xff] %v621
  %630 = vst [vmem:[#allocation3 + $0x118] sm:$0xff] %v622
  %v631 = vld [vmem:[%s1] sm:$0xff]
  %v632 = vld [vmem:[#allocation3] sm:$0xff]
  %v633 = vld [vmem:[#allocation3 + $0x8] sm:$0xff]
  %v634 = vld [vmem:[#allocation3 + $0x10] sm:$0xff]
  %v635 = vld [vmem:[#allocation3 + $0x18] sm:$0xff]
  %v636 = vld [vmem:[#allocation3 + $0x20] sm:$0xff]
  %v637 = vld [vmem:[#allocation3 + $0x28] sm:$0xff]
  %v638 = vld [vmem:[#allocation3 + $0x30] sm:$0xff]
  %v639 = vld [vmem:[#allocation3 + $0x38] sm:$0xff]
  %v640 = vld [vmem:[#allocation3 + $0x40] sm:$0xff]
  %v641 = vld [vmem:[#allocation3 + $0x48] sm:$0xff]
  %v642 = vld [vmem:[#allocation3 + $0x50] sm:$0xff]
  %v643 = vld [vmem:[#allocation3 + $0x58] sm:$0xff]
  %v644 = vld [vmem:[#allocation3 + $0x60] sm:$0xff]
  %v645 = vld [vmem:[#allocation3 + $0x68] sm:$0xff]
  %v646 = vld [vmem:[#allocation3 + $0x70] sm:$0xff]
  %v647 = vld [vmem:[#allocation3 + $0x78] sm:$0xff]
  %v648 = vld [vmem:[#allocation3 + $0x80] sm:$0xff]
  %v649 = vld [vmem:[#allocation3 + $0x88] sm:$0xff]
  %v650 = vld [vmem:[#allocation3 + $0x90] sm:$0xff]
  %v651 = vld [vmem:[#allocation3 + $0x98] sm:$0xff]
  %v652 = vld [vmem:[#allocation3 + $0xa0] sm:$0xff]
  %v653 = vld [vmem:[#allocation3 + $0xa8] sm:$0xff]
  %v654 = vld [vmem:[#allocation3 + $0xb0] sm:$0xff]
  %v655 = vld [vmem:[#allocation3 + $0xb8] sm:$0xff]
  %v656 = vld [vmem:[#allocation3 + $0xc0] sm:$0xff]
  %v657 = vld [vmem:[#allocation3 + $0xc8] sm:$0xff]
  %v658 = vld [vmem:[#allocation3 + $0xd0] sm:$0xff]
  %v659 = vld [vmem:[#allocation3 + $0xd8] sm:$0xff]
  %v660 = vld [vmem:[#allocation3 + $0xe0] sm:$0xff]
  %v661 = vld [vmem:[#allocation3 + $0xe8] sm:$0xff]
  %v662 = vld [vmem:[#allocation3 + $0xf0] sm:$0xff]
  %v663 = vld [vmem:[#allocation3 + $0xf8] sm:$0xff]
  %v664 = vld [vmem:[#allocation3 + $0x100] sm:$0xff]
  %v665 = vld [vmem:[#allocation3 + $0x108] sm:$0xff]
  %v666 = vld [vmem:[#allocation3 + $0x110] sm:$0xff]
  %v667 = vld [vmem:[#allocation3 + $0x118] sm:$0xff]
  %vm668 = vcmask 588800
  %v670 = vsel %vm668, %v631, 0
  %672 = vmatpush.msra.mxu0 0.0
  %673 = vmatpush.msra.mxu0 0.0
  %674 = vmatpush.msra.mxu0 0.0
  %675 = vmatpush.msra.mxu0 0.0
  %676 = vmatpush.msra.mxu0 0.0
  %677 = vmatpush.msra.mxu0 0.0
  %678 = vmatpush.msra.mxu0 0.0
  %679 = vmatpush.msra.mxu0 %v664
  %680 = vmatpush.msra.mxu0 %v660
  %681 = vmatpush.msra.mxu0 %v656
  %682 = vmatpush.msra.mxu0 %v652
  %683 = vmatpush.msra.mxu0 %v648
  %684 = vmatpush.msra.mxu0 %v644
  %685 = vmatpush.msra.mxu0 %v640
  %686 = vmatpush.msra.mxu0 %v636
  %687 = vmatpush.msra.mxu0 %v632
  %688 = vmatmul.f32.gmra.mxu0 %v670
  %v689 = vpop.f32.mrf.mxu0
  %v690 = vadd.f32 0.0, %v689
  %691 = vdwg.mxu0
  %692 = vmatpush.msra.mxu0 0.0
  %693 = vmatpush.msra.mxu0 0.0
  %694 = vmatpush.msra.mxu0 0.0
  %695 = vmatpush.msra.mxu0 0.0
  %696 = vmatpush.msra.mxu0 0.0
  %697 = vmatpush.msra.mxu0 0.0
  %698 = vmatpush.msra.mxu0 0.0
  %699 = vmatpush.msra.mxu0 %v665
  %700 = vmatpush.msra.mxu0 %v661
  %701 = vmatpush.msra.mxu0 %v657
  %702 = vmatpush.msra.mxu0 %v653
  %703 = vmatpush.msra.mxu0 %v649
  %704 = vmatpush.msra.mxu0 %v645
  %705 = vmatpush.msra.mxu0 %v641
  %706 = vmatpush.msra.mxu0 %v637
  %707 = vmatpush.msra.mxu0 %v633
  %708 = vmatmul.f32.gmra.mxu0 %v670
  %v709 = vpop.f32.mrf.mxu0
  %v710 = vadd.f32 0.0, %v709
  %711 = vdwg.mxu0
  %712 = vmatpush.msra.mxu0 0.0
  %713 = vmatpush.msra.mxu0 0.0
  %714 = vmatpush.msra.mxu0 0.0
  %715 = vmatpush.msra.mxu0 0.0
  %716 = vmatpush.msra.mxu0 0.0
  %717 = vmatpush.msra.mxu0 0.0
  %718 = vmatpush.msra.mxu0 0.0
  %719 = vmatpush.msra.mxu0 %v666
  %720 = vmatpush.msra.mxu0 %v662
  %721 = vmatpush.msra.mxu0 %v658
  %722 = vmatpush.msra.mxu0 %v654
  %723 = vmatpush.msra.mxu0 %v650
  %724 = vmatpush.msra.mxu0 %v646
  %725 = vmatpush.msra.mxu0 %v642
  %726 = vmatpush.msra.mxu0 %v638
  %727 = vmatpush.msra.mxu0 %v634
  %728 = vmatmul.f32.gmra.mxu0 %v670
  %v729 = vpop.f32.mrf.mxu0
  %v730 = vadd.f32 0.0, %v729
  %731 = vdwg.mxu0
  %732 = vmatpush.msra.mxu0 0.0
  %733 = vmatpush.msra.mxu0 0.0
  %734 = vmatpush.msra.mxu0 0.0
  %735 = vmatpush.msra.mxu0 0.0
  %736 = vmatpush.msra.mxu0 0.0
  %737 = vmatpush.msra.mxu0 0.0
  %738 = vmatpush.msra.mxu0 0.0
  %739 = vmatpush.msra.mxu0 %v667
  %740 = vmatpush.msra.mxu0 %v663
  %741 = vmatpush.msra.mxu0 %v659
  %742 = vmatpush.msra.mxu0 %v655
  %743 = vmatpush.msra.mxu0 %v651
  %744 = vmatpush.msra.mxu0 %v647
  %745 = vmatpush.msra.mxu0 %v643
  %746 = vmatpush.msra.mxu0 %v639
  %747 = vmatpush.msra.mxu0 %v635
  %748 = vmatmul.f32.gmra.mxu0 %v670
  %v749 = vpop.f32.mrf.mxu0
  %v750 = vadd.f32 0.0, %v749
  %751 = vdwg.mxu0
  %v752 = vadd.f32 %v690, %v710
  %v753 = vadd.f32 %v752, %v730
  %v754 = vadd.f32 %v753, %v750
  %755 = vadd.xlane.f32.xlu0 %v754
  %v756 = vpop.xlane.xlu0 %755
  %v757 = vmul.f32 %v756, 0.001953125
  %v758 = vsub.f32 %v690, %v757
  %v759 = vsub.f32 %v710, %v757
  %v760 = vsub.f32 %v730, %v757
  %v761 = vsub.f32 %v750, %v757
  %v762 = vmul.f32 %v758, %v758
  %v763 = vmul.f32 %v759, %v759
  %v764 = vmul.f32 %v760, %v760
  %v765 = vmul.f32 %v761, %v761
  %v766 = vadd.f32 %v762, %v763
  %v767 = vadd.f32 %v766, %v764
  %v768 = vadd.f32 %v767, %v765
  %769 = vadd.xlane.f32.xlu0 %v768
  %v770 = vpop.xlane.xlu0 %769
  %v771 = vmul.f32 %v770, 0.001953125
  %v772 = vadd.f32 %v771, 1e-05
  %v773 = vrsqrt.pop %v772
  %v774 = vmul.f32 %v773, %v772
  %v775 = vmul.f32 %v774, %v773
  %v776 = vmul.f32 0.5, %v775
  %v777 = vsub.f32 1.5, %v776
  %v778 = vmul.f32 %v773, %v777
  %vm779 = vweird.f32 %v772
  %vm780 = vweird.f32 %v773
  %vm781 = vmor %vm779, %vm780
  %v782 = vsel %vm781, %v773, %v778
  %v783 = vld [vmem:[%s2] sm:$0xff]
  %v784 = vmul.f32 %v782, %v783
  %786 = vset.pattern.permute.xlu0 0
  %787 = vperm.xlu0 %786, %v784
  %v788 = vpop.permute.xlu0 %787
  %v790 = vmul.f32 %v758, %v788
  %v791 = vmul.f32 %v759, %v788
  %v792 = vmul.f32 %v760, %v788
  %v793 = vmul.f32 %v761, %v788
  %v794 = vld [vmem:[%s3] sm:$0xff]
  %796 = vset.pattern.permute.xlu0 0
  %797 = vperm.xlu0 %796, %v794
  %v798 = vpop.permute.xlu0 %797
  %v800 = vadd.f32 %v790, %v798
  %v801 = vadd.f32 %v791, %v798
  %v802 = vadd.f32 %v792, %v798
  %v803 = vadd.f32 %v793, %v798
  %v804 = vmax.f32 %v800, 0.0
  %v805 = vmax.f32 %v801, 0.0
  %v806 = vmax.f32 %v802, 0.0
  %v807 = vmax.f32 %v803, 0.0
  %812 = vrot.lane.b32.xlu0 %v804, 17
  %v813 = vpop.permute.xlu0 %812
  %814 = vrot.lane.b32.xlu0 %v805, 17
  %v815 = vpop.permute.xlu0 %814
  %816 = vrot.lane.b32.xlu0 %v806, 17
  %v817 = vpop.permute.xlu0 %816
  %818 = vrot.lane.b32.xlu0 %v807, 17
  %v819 = vpop.permute.xlu0 %818
  %v820 = vsel %vm139, %v813, %v815
  %v821 = vsel %vm139, %v815, %v817
  %v822 = vsel %vm139, %v817, %v819
  %828 = vst.msk [vmem:[#allocation2] sm:$0xff] %vm167, %v813
  %829 = vst [vmem:[#allocation2 + $0x8] sm:$0xff] %v820
  %830 = vst [vmem:[#allocation2 + $0x10] sm:$0xff] %v821
  %831 = vst [vmem:[#allocation2 + $0x18] sm:$0xff] %v822
  %832 = vst.msk [vmem:[#allocation2 + $0x20] sm:$0xff] %vm139, %v819
  %v833 = vld [vmem:[#allocation2] sm:$0xff]
  %v834 = vld [vmem:[#allocation2 + $0x8] sm:$0xff]
  %v835 = vld [vmem:[#allocation2 + $0x10] sm:$0xff]
  %v836 = vld [vmem:[#allocation2 + $0x18] sm:$0xff]
  %v837 = vmul.f32 %v833, %v59
  %v838 = vmul.f32 %v834, %v60
  %v839 = vmul.f32 %v835, %v61
  %v840 = vmul.f32 %v836, %v62
  %841 = vst [vmem:[#allocation3] sm:$0xff] %v837
  %842 = vst [vmem:[#allocation3 + $0x8] sm:$0xff] %v838
  %843 = vst [vmem:[#allocation3 + $0x10] sm:$0xff] %v839
  %844 = vst [vmem:[#allocation3 + $0x18] sm:$0xff] %v840
  %v845 = vld [vmem:[#allocation2] sm:$0xff]
  %v846 = vld [vmem:[#allocation2 + $0x8] sm:$0xff]
  %v847 = vld [vmem:[#allocation2 + $0x10] sm:$0xff]
  %v848 = vld [vmem:[#allocation2 + $0x18] sm:$0xff]
  %v849 = vld [vmem:[#allocation2 + $0x20] sm:$0xff]
  %v850 = vmul.f32 %v845, %v195
  %v851 = vmul.f32 %v846, %v203
  %v852 = vmul.f32 %v847, %v204
  %v853 = vmul.f32 %v848, %v205
  %v854 = vmul.f32 %v849, %v201
  %860 = vrot.lane.b32.xlu0 %v850, 127
  %v861 = vpop.permute.xlu0 %860
  %862 = vrot.lane.b32.xlu0 %v851, 127
  %v863 = vpop.permute.xlu0 %862
  %864 = vrot.lane.b32.xlu0 %v852, 127
  %v865 = vpop.permute.xlu0 %864
  %866 = vrot.lane.b32.xlu0 %v853, 127
  %v867 = vpop.permute.xlu0 %866
  %868 = vrot.lane.b32.xlu0 %v854, 127
  %v869 = vpop.permute.xlu0 %868
  %v870 = vsel %vm231, %v861, %v863
  %v871 = vsel %vm231, %v863, %v865
  %v872 = vsel %vm231, %v865, %v867
  %v873 = vsel %vm231, %v867, %v869
  %878 = vst [vmem:[#allocation3 + $0x20] sm:$0xff] %v870
  %879 = vst [vmem:[#allocation3 + $0x28] sm:$0xff] %v871
  %880 = vst [vmem:[#allocation3 + $0x30] sm:$0xff] %v872
  %881 = vst [vmem:[#allocation3 + $0x38] sm:$0xff] %v873
  %v882 = vld [vmem:[#allocation2] sm:$0xff]
  %v883 = vld [vmem:[#allocation2 + $0x8] sm:$0xff]
  %v884 = vld [vmem:[#allocation2 + $0x10] sm:$0xff]
  %v885 = vld [vmem:[#allocation2 + $0x18] sm:$0xff]
  %v886 = vld [vmem:[#allocation2 + $0x20] sm:$0xff]
  %v887 = vmul.f32 %v882, %v254
  %v888 = vmul.f32 %v883, %v262
  %v889 = vmul.f32 %v884, %v263
  %v890 = vmul.f32 %v885, %v264
  %v891 = vmul.f32 %v886, %v260
  %897 = vrot.lane.b32.xlu0 %v887, 126
  %v898 = vpop.permute.xlu0 %897
  %899 = vrot.lane.b32.xlu0 %v888, 126
  %v900 = vpop.permute.xlu0 %899
  %901 = vrot.lane.b32.xlu0 %v889, 126
  %v902 = vpop.permute.xlu0 %901
  %903 = vrot.lane.b32.xlu0 %v890, 126
  %v904 = vpop.permute.xlu0 %903
  %905 = vrot.lane.b32.xlu0 %v891, 126
  %v906 = vpop.permute.xlu0 %905
  %v907 = vsel %vm290, %v898, %v900
  %v908 = vsel %vm290, %v900, %v902
  %v909 = vsel %vm290, %v902, %v904
  %v910 = vsel %vm290, %v904, %v906
  %915 = vst [vmem:[#allocation3 + $0x40] sm:$0xff] %v907
  %916 = vst [vmem:[#allocation3 + $0x48] sm:$0xff] %v908
  %917 = vst [vmem:[#allocation3 + $0x50] sm:$0xff] %v909
  %918 = vst [vmem:[#allocation3 + $0x58] sm:$0xff] %v910
  %v919 = vld [vmem:[#allocation2] sm:$0xff]
  %v920 = vld [vmem:[#allocation2 + $0x8] sm:$0xff]
  %v921 = vld [vmem:[#allocation2 + $0x10] sm:$0xff]
  %v922 = vld [vmem:[#allocation2 + $0x18] sm:$0xff]
  %v923 = vld [vmem:[#allocation2 + $0x20] sm:$0xff]
  %v924 = vmul.f32 %v919, %v313
  %v925 = vmul.f32 %v920, %v321
  %v926 = vmul.f32 %v921, %v322
  %v927 = vmul.f32 %v922, %v323
  %v928 = vmul.f32 %v923, %v319
  %934 = vrot.lane.b32.xlu0 %v924, 112
  %v935 = vpop.permute.xlu0 %934
  %936 = vrot.lane.b32.xlu0 %v925, 112
  %v937 = vpop.permute.xlu0 %936
  %938 = vrot.lane.b32.xlu0 %v926, 112
  %v939 = vpop.permute.xlu0 %938
  %940 = vrot.lane.b32.xlu0 %v927, 112
  %v941 = vpop.permute.xlu0 %940
  %942 = vrot.lane.b32.xlu0 %v928, 112
  %v943 = vpop.permute.xlu0 %942
  %v944 = vsel %vm349, %v935, %v937
  %v945 = vsel %vm349, %v937, %v939
  %v946 = vsel %vm349, %v939, %v941
  %v947 = vsel %vm349, %v941, %v943
  %952 = vst [vmem:[#allocation3 + $0x60] sm:$0xff] %v944
  %953 = vst [vmem:[#allocation3 + $0x68] sm:$0xff] %v945
  %954 = vst [vmem:[#allocation3 + $0x70] sm:$0xff] %v946
  %955 = vst [vmem:[#allocation3 + $0x78] sm:$0xff] %v947
  %v956 = vld [vmem:[#allocation2] sm:$0xff]
  %v957 = vld [vmem:[#allocation2 + $0x8] sm:$0xff]
  %v958 = vld [vmem:[#allocation2 + $0x10] sm:$0xff]
  %v959 = vld [vmem:[#allocation2 + $0x18] sm:$0xff]
  %v960 = vld [vmem:[#allocation2 + $0x20] sm:$0xff]
  %966 = vrot.lane.b32.xlu0 %v956, 111
  %v967 = vpop.permute.xlu0 %966
  %968 = vrot.lane.b32.xlu0 %v957, 111
  %v969 = vpop.permute.xlu0 %968
  %970 = vrot.lane.b32.xlu0 %v958, 111
  %v971 = vpop.permute.xlu0 %970
  %972 = vrot.lane.b32.xlu0 %v959, 111
  %v973 = vpop.permute.xlu0 %972
  %974 = vrot.lane.b32.xlu0 %v960, 111
  %v975 = vpop.permute.xlu0 %974
  %v976 = vsel %vm382, %v967, %v969
  %v977 = vsel %vm382, %v969, %v971
  %v978 = vsel %vm382, %v971, %v973
  %v979 = vsel %vm382, %v973, %v975
  %984 = vst [vmem:[#allocation3 + $0x80] sm:$0xff] %v976
  %985 = vst [vmem:[#allocation3 + $0x88] sm:$0xff] %v977
  %986 = vst [vmem:[#allocation3 + $0x90] sm:$0xff] %v978
  %987 = vst [vmem:[#allocation3 + $0x98] sm:$0xff] %v979
  %v988 = vld [vmem:[#allocation2] sm:$0xff]
  %v989 = vld [vmem:[#allocation2 + $0x8] sm:$0xff]
  %v990 = vld [vmem:[#allocation2 + $0x10] sm:$0xff]
  %v991 = vld [vmem:[#allocation2 + $0x18] sm:$0xff]
  %v992 = vld [vmem:[#allocation2 + $0x20] sm:$0xff]
  %v993 = vmul.f32 %v988, %v405
  %v994 = vmul.f32 %v989, %v413
  %v995 = vmul.f32 %v990, %v414
  %v996 = vmul.f32 %v991, %v415
  %v997 = vmul.f32 %v992, %v411
  %1003 = vrot.lane.b32.xlu0 %v993, 110
  %v1004 = vpop.permute.xlu0 %1003
  %1005 = vrot.lane.b32.xlu0 %v994, 110
  %v1006 = vpop.permute.xlu0 %1005
  %1007 = vrot.lane.b32.xlu0 %v995, 110
  %v1008 = vpop.permute.xlu0 %1007
  %1009 = vrot.lane.b32.xlu0 %v996, 110
  %v1010 = vpop.permute.xlu0 %1009
  %1011 = vrot.lane.b32.xlu0 %v997, 110
  %v1012 = vpop.permute.xlu0 %1011
  %v1013 = vsel %vm441, %v1004, %v1006
  %v1014 = vsel %vm441, %v1006, %v1008
  %v1015 = vsel %vm441, %v1008, %v1010
  %v1016 = vsel %vm441, %v1010, %v1012
  %1021 = vst [vmem:[#allocation3 + $0xa0] sm:$0xff] %v1013
  %1022 = vst [vmem:[#allocation3 + $0xa8] sm:$0xff] %v1014
  %1023 = vst [vmem:[#allocation3 + $0xb0] sm:$0xff] %v1015
  %1024 = vst [vmem:[#allocation3 + $0xb8] sm:$0xff] %v1016
  %v1025 = vld [vmem:[#allocation2] sm:$0xff]
  %v1026 = vld [vmem:[#allocation2 + $0x8] sm:$0xff]
  %v1027 = vld [vmem:[#allocation2 + $0x10] sm:$0xff]
  %v1028 = vld [vmem:[#allocation2 + $0x18] sm:$0xff]
  %v1029 = vld [vmem:[#allocation2 + $0x20] sm:$0xff]
  %v1030 = vmul.f32 %v1025, %v464
  %v1031 = vmul.f32 %v1026, %v472
  %v1032 = vmul.f32 %v1027, %v473
  %v1033 = vmul.f32 %v1028, %v474
  %v1034 = vmul.f32 %v1029, %v470
  %1040 = vrot.lane.b32.xlu0 %v1030, 96
  %v1041 = vpop.permute.xlu0 %1040
  %1042 = vrot.lane.b32.xlu0 %v1031, 96
  %v1043 = vpop.permute.xlu0 %1042
  %1044 = vrot.lane.b32.xlu0 %v1032, 96
  %v1045 = vpop.permute.xlu0 %1044
  %1046 = vrot.lane.b32.xlu0 %v1033, 96
  %v1047 = vpop.permute.xlu0 %1046
  %1048 = vrot.lane.b32.xlu0 %v1034, 96
  %v1049 = vpop.permute.xlu0 %1048
  %v1050 = vsel %vm500, %v1041, %v1043
  %v1051 = vsel %vm500, %v1043, %v1045
  %v1052 = vsel %vm500, %v1045, %v1047
  %v1053 = vsel %vm500, %v1047, %v1049
  %1058 = vst [vmem:[#allocation3 + $0xc0] sm:$0xff] %v1050
  %1059 = vst [vmem:[#allocation3 + $0xc8] sm:$0xff] %v1051
  %1060 = vst [vmem:[#allocation3 + $0xd0] sm:$0xff] %v1052
  %1061 = vst [vmem:[#allocation3 + $0xd8] sm:$0xff] %v1053
  %v1062 = vld [vmem:[#allocation2] sm:$0xff]
  %v1063 = vld [vmem:[#allocation2 + $0x8] sm:$0xff]
  %v1064 = vld [vmem:[#allocation2 + $0x10] sm:$0xff]
  %v1065 = vld [vmem:[#allocation2 + $0x18] sm:$0xff]
  %v1066 = vld [vmem:[#allocation2 + $0x20] sm:$0xff]
  %v1067 = vmul.f32 %v1062, %v523
  %v1068 = vmul.f32 %v1063, %v531
  %v1069 = vmul.f32 %v1064, %v532
  %v1070 = vmul.f32 %v1065, %v533
  %v1071 = vmul.f32 %v1066, %v529
  %1077 = vrot.lane.b32.xlu0 %v1067, 95
  %v1078 = vpop.permute.xlu0 %1077
  %1079 = vrot.lane.b32.xlu0 %v1068, 95
  %v1080 = vpop.permute.xlu0 %1079
  %1081 = vrot.lane.b32.xlu0 %v1069, 95
  %v1082 = vpop.permute.xlu0 %1081
  %1083 = vrot.lane.b32.xlu0 %v1070, 95
  %v1084 = vpop.permute.xlu0 %1083
  %1085 = vrot.lane.b32.xlu0 %v1071, 95
  %v1086 = vpop.permute.xlu0 %1085
  %v1087 = vsel %vm559, %v1078, %v1080
  %v1088 = vsel %vm559, %v1080, %v1082
  %v1089 = vsel %vm559, %v1082, %v1084
  %v1090 = vsel %vm559, %v1084, %v1086
  %1095 = vst [vmem:[#allocation3 + $0xe0] sm:$0xff] %v1087
  %1096 = vst [vmem:[#allocation3 + $0xe8] sm:$0xff] %v1088
  %1097 = vst [vmem:[#allocation3 + $0xf0] sm:$0xff] %v1089
  %1098 = vst [vmem:[#allocation3 + $0xf8] sm:$0xff] %v1090
  %v1099 = vld [vmem:[#allocation2] sm:$0xff]
  %v1100 = vld [vmem:[#allocation2 + $0x8] sm:$0xff]
  %v1101 = vld [vmem:[#allocation2 + $0x10] sm:$0xff]
  %v1102 = vld [vmem:[#allocation2 + $0x18] sm:$0xff]
  %v1103 = vld [vmem:[#allocation2 + $0x20] sm:$0xff]
  %v1104 = vmul.f32 %v1099, %v582
  %v1105 = vmul.f32 %v1100, %v590
  %v1106 = vmul.f32 %v1101, %v591
  %v1107 = vmul.f32 %v1102, %v592
  %v1108 = vmul.f32 %v1103, %v588
  %1114 = vrot.lane.b32.xlu0 %v1104, 94
  %v1115 = vpop.permute.xlu0 %1114
  %1116 = vrot.lane.b32.xlu0 %v1105, 94
  %v1117 = vpop.permute.xlu0 %1116
  %1118 = vrot.lane.b32.xlu0 %v1106, 94
  %v1119 = vpop.permute.xlu0 %1118
  %1120 = vrot.lane.b32.xlu0 %v1107, 94
  %v1121 = vpop.permute.xlu0 %1120
  %1122 = vrot.lane.b32.xlu0 %v1108, 94
  %v1123 = vpop.permute.xlu0 %1122
  %v1124 = vsel %vm618, %v1115, %v1117
  %v1125 = vsel %vm618, %v1117, %v1119
  %v1126 = vsel %vm618, %v1119, %v1121
  %v1127 = vsel %vm618, %v1121, %v1123
  %1132 = vst [vmem:[#allocation3 + $0x100] sm:$0xff] %v1124
  %1133 = vst [vmem:[#allocation3 + $0x108] sm:$0xff] %v1125
  %1134 = vst [vmem:[#allocation3 + $0x110] sm:$0xff] %v1126
  %1135 = vst [vmem:[#allocation3 + $0x118] sm:$0xff] %v1127
  %v1136 = vld [vmem:[%s4] sm:$0xff]
  %v1137 = vld [vmem:[#allocation3] sm:$0xff]
  %v1138 = vld [vmem:[#allocation3 + $0x8] sm:$0xff]
  %v1139 = vld [vmem:[#allocation3 + $0x10] sm:$0xff]
  %v1140 = vld [vmem:[#allocation3 + $0x18] sm:$0xff]
  %v1141 = vld [vmem:[#allocation3 + $0x20] sm:$0xff]
  %v1142 = vld [vmem:[#allocation3 + $0x28] sm:$0xff]
  %v1143 = vld [vmem:[#allocation3 + $0x30] sm:$0xff]
  %v1144 = vld [vmem:[#allocation3 + $0x38] sm:$0xff]
  %v1145 = vld [vmem:[#allocation3 + $0x40] sm:$0xff]
  %v1146 = vld [vmem:[#allocation3 + $0x48] sm:$0xff]
  %v1147 = vld [vmem:[#allocation3 + $0x50] sm:$0xff]
  %v1148 = vld [vmem:[#allocation3 + $0x58] sm:$0xff]
  %v1149 = vld [vmem:[#allocation3 + $0x60] sm:$0xff]
  %v1150 = vld [vmem:[#allocation3 + $0x68] sm:$0xff]
  %v1151 = vld [vmem:[#allocation3 + $0x70] sm:$0xff]
  %v1152 = vld [vmem:[#allocation3 + $0x78] sm:$0xff]
  %v1153 = vld [vmem:[#allocation3 + $0x80] sm:$0xff]
  %v1154 = vld [vmem:[#allocation3 + $0x88] sm:$0xff]
  %v1155 = vld [vmem:[#allocation3 + $0x90] sm:$0xff]
  %v1156 = vld [vmem:[#allocation3 + $0x98] sm:$0xff]
  %v1157 = vld [vmem:[#allocation3 + $0xa0] sm:$0xff]
  %v1158 = vld [vmem:[#allocation3 + $0xa8] sm:$0xff]
  %v1159 = vld [vmem:[#allocation3 + $0xb0] sm:$0xff]
  %v1160 = vld [vmem:[#allocation3 + $0xb8] sm:$0xff]
  %v1161 = vld [vmem:[#allocation3 + $0xc0] sm:$0xff]
  %v1162 = vld [vmem:[#allocation3 + $0xc8] sm:$0xff]
  %v1163 = vld [vmem:[#allocation3 + $0xd0] sm:$0xff]
  %v1164 = vld [vmem:[#allocation3 + $0xd8] sm:$0xff]
  %v1165 = vld [vmem:[#allocation3 + $0xe0] sm:$0xff]
  %v1166 = vld [vmem:[#allocation3 + $0xe8] sm:$0xff]
  %v1167 = vld [vmem:[#allocation3 + $0xf0] sm:$0xff]
  %v1168 = vld [vmem:[#allocation3 + $0xf8] sm:$0xff]
  %v1169 = vld [vmem:[#allocation3 + $0x100] sm:$0xff]
  %v1170 = vld [vmem:[#allocation3 + $0x108] sm:$0xff]
  %v1171 = vld [vmem:[#allocation3 + $0x110] sm:$0xff]
  %v1172 = vld [vmem:[#allocation3 + $0x118] sm:$0xff]
  %v1174 = vsel %vm668, %v1136, 0
  %1176 = vmatpush.msra.mxu0 0.0
  %1177 = vmatpush.msra.mxu0 0.0
  %1178 = vmatpush.msra.mxu0 0.0
  %1179 = vmatpush.msra.mxu0 0.0
  %1180 = vmatpush.msra.mxu0 0.0
  %1181 = vmatpush.msra.mxu0 0.0
  %1182 = vmatpush.msra.mxu0 0.0
  %1183 = vmatpush.msra.mxu0 %v1169
  %1184 = vmatpush.msra.mxu0 %v1165
  %1185 = vmatpush.msra.mxu0 %v1161
  %1186 = vmatpush.msra.mxu0 %v1157
  %1187 = vmatpush.msra.mxu0 %v1153
  %1188 = vmatpush.msra.mxu0 %v1149
  %1189 = vmatpush.msra.mxu0 %v1145
  %1190 = vmatpush.msra.mxu0 %v1141
  %1191 = vmatpush.msra.mxu0 %v1137
  %1192 = vmatmul.f32.gmra.mxu0 %v1174
  %v1193 = vpop.f32.mrf.mxu0
  %v1194 = vadd.f32 0.0, %v1193
  %1195 = vdwg.mxu0
  %1196 = vmatpush.msra.mxu0 0.0
  %1197 = vmatpush.msra.mxu0 0.0
  %1198 = vmatpush.msra.mxu0 0.0
  %1199 = vmatpush.msra.mxu0 0.0
  %1200 = vmatpush.msra.mxu0 0.0
  %1201 = vmatpush.msra.mxu0 0.0
  %1202 = vmatpush.msra.mxu0 0.0
  %1203 = vmatpush.msra.mxu0 %v1170
  %1204 = vmatpush.msra.mxu0 %v1166
  %1205 = vmatpush.msra.mxu0 %v1162
  %1206 = vmatpush.msra.mxu0 %v1158
  %1207 = vmatpush.msra.mxu0 %v1154
  %1208 = vmatpush.msra.mxu0 %v1150
  %1209 = vmatpush.msra.mxu0 %v1146
  %1210 = vmatpush.msra.mxu0 %v1142
  %1211 = vmatpush.msra.mxu0 %v1138
  %1212 = vmatmul.f32.gmra.mxu0 %v1174
  %v1213 = vpop.f32.mrf.mxu0
  %v1214 = vadd.f32 0.0, %v1213
  %1215 = vdwg.mxu0
  %1216 = vmatpush.msra.mxu0 0.0
  %1217 = vmatpush.msra.mxu0 0.0
  %1218 = vmatpush.msra.mxu0 0.0
  %1219 = vmatpush.msra.mxu0 0.0
  %1220 = vmatpush.msra.mxu0 0.0
  %1221 = vmatpush.msra.mxu0 0.0
  %1222 = vmatpush.msra.mxu0 0.0
  %1223 = vmatpush.msra.mxu0 %v1171
  %1224 = vmatpush.msra.mxu0 %v1167
  %1225 = vmatpush.msra.mxu0 %v1163
  %1226 = vmatpush.msra.mxu0 %v1159
  %1227 = vmatpush.msra.mxu0 %v1155
  %1228 = vmatpush.msra.mxu0 %v1151
  %1229 = vmatpush.msra.mxu0 %v1147
  %1230 = vmatpush.msra.mxu0 %v1143
  %1231 = vmatpush.msra.mxu0 %v1139
  %1232 = vmatmul.f32.gmra.mxu0 %v1174
  %v1233 = vpop.f32.mrf.mxu0
  %v1234 = vadd.f32 0.0, %v1233
  %1235 = vdwg.mxu0
  %1236 = vmatpush.msra.mxu0 0.0
  %1237 = vmatpush.msra.mxu0 0.0
  %1238 = vmatpush.msra.mxu0 0.0
  %1239 = vmatpush.msra.mxu0 0.0
  %1240 = vmatpush.msra.mxu0 0.0
  %1241 = vmatpush.msra.mxu0 0.0
  %1242 = vmatpush.msra.mxu0 0.0
  %1243 = vmatpush.msra.mxu0 %v1172
  %1244 = vmatpush.msra.mxu0 %v1168
  %1245 = vmatpush.msra.mxu0 %v1164
  %1246 = vmatpush.msra.mxu0 %v1160
  %1247 = vmatpush.msra.mxu0 %v1156
  %1248 = vmatpush.msra.mxu0 %v1152
  %1249 = vmatpush.msra.mxu0 %v1148
  %1250 = vmatpush.msra.mxu0 %v1144
  %1251 = vmatpush.msra.mxu0 %v1140
  %1252 = vmatmul.f32.gmra.mxu0 %v1174
  %v1253 = vpop.f32.mrf.mxu0
  %v1254 = vadd.f32 0.0, %v1253
  %1255 = vdwg.mxu0
  %v1256 = vadd.f32 %v1194, %v1214
  %v1257 = vadd.f32 %v1256, %v1234
  %v1258 = vadd.f32 %v1257, %v1254
  %1259 = vadd.xlane.f32.xlu0 %v1258
  %v1260 = vpop.xlane.xlu0 %1259
  %v1261 = vmul.f32 %v1260, 0.001953125
  %v1262 = vsub.f32 %v1194, %v1261
  %v1263 = vsub.f32 %v1214, %v1261
  %v1264 = vsub.f32 %v1234, %v1261
  %v1265 = vsub.f32 %v1254, %v1261
  %v1266 = vmul.f32 %v1262, %v1262
  %v1267 = vmul.f32 %v1263, %v1263
  %v1268 = vmul.f32 %v1264, %v1264
  %v1269 = vmul.f32 %v1265, %v1265
  %v1270 = vadd.f32 %v1266, %v1267
  %v1271 = vadd.f32 %v1270, %v1268
  %v1272 = vadd.f32 %v1271, %v1269
  %1273 = vadd.xlane.f32.xlu0 %v1272
  %v1274 = vpop.xlane.xlu0 %1273
  %v1275 = vmul.f32 %v1274, 0.001953125
  %v1276 = vadd.f32 %v1275, 1e-05
  %v1277 = vrsqrt.pop %v1276
  %v1278 = vmul.f32 %v1277, %v1276
  %v1279 = vmul.f32 %v1278, %v1277
  %v1280 = vmul.f32 0.5, %v1279
  %v1281 = vsub.f32 1.5, %v1280
  %v1282 = vmul.f32 %v1277, %v1281
  %vm1283 = vweird.f32 %v1276
  %vm1284 = vweird.f32 %v1277
  %vm1285 = vmor %vm1283, %vm1284
  %v1286 = vsel %vm1285, %v1277, %v1282
  %v1287 = vld [vmem:[%s5] sm:$0xff]
  %v1288 = vmul.f32 %v1286, %v1287
  %1290 = vset.pattern.permute.xlu0 0
  %1291 = vperm.xlu0 %1290, %v1288
  %v1292 = vpop.permute.xlu0 %1291
  %v1294 = vmul.f32 %v1262, %v1292
  %v1295 = vmul.f32 %v1263, %v1292
  %v1296 = vmul.f32 %v1264, %v1292
  %v1297 = vmul.f32 %v1265, %v1292
  %v1298 = vld [vmem:[%s6] sm:$0xff]
  %1300 = vset.pattern.permute.xlu0 0
  %1301 = vperm.xlu0 %1300, %v1298
  %v1302 = vpop.permute.xlu0 %1301
  %v1304 = vadd.f32 %v1294, %v1302
  %v1305 = vadd.f32 %v1295, %v1302
  %v1306 = vadd.f32 %v1296, %v1302
  %v1307 = vadd.f32 %v1297, %v1302
  %v1308 = vadd.f32 %v1304, %v143
  %v1309 = vadd.f32 %v1305, %v144
  %v1310 = vadd.f32 %v1306, %v145
  %v1311 = vadd.f32 %v1307, %v146
  %v1312 = vmax.f32 %v1308, 0.0
  %v1313 = vmax.f32 %v1309, 0.0
  %v1314 = vmax.f32 %v1310, 0.0
  %v1315 = vmax.f32 %v1311, 0.0
  %1316 = vst [vmem:[%s7] sm:$0xff] %v1312
  %1317 = vst [vmem:[%s7 + $0x8] sm:$0xff] %v1313
  %1318 = vst [vmem:[%s7 + $0x10] sm:$0xff] %v1314
  %1319 = vst [vmem:[%s7 + $0x18] sm:$0xff] %v1315
  // Predicated region
  $region30: #{residual_block_pallas.1} parent=0 // pred_check
    _
  $region31: #{residual_block_pallas.1} parent=0 // pred_check_branch
    %1321 = sbr.rel (0) target = $region33
  $region32: #{residual_block_pallas.1} parent=0 // pred_region
    _
  $region33: #{residual_block_pallas.1} parent=0 // pred_fallthru
    _
  // Predicated region
  $region34: #{residual_block_pallas.1} parent=0 // pred_check
    _
  $region35: #{residual_block_pallas.1} parent=0 // pred_check_branch
    %1323 = sbr.rel (0) target = $region37
  $region36: #{residual_block_pallas.1} parent=0 // pred_region
    _
  $region37: #{residual_block_pallas.1} parent=0 // pred_fallthru
    _

</llo_original>
